<compile_context>
chip_gen: v7x
topology: tpu7x:2x2x1
jax: 0.10.0
libtpu: 0.0.40
codegen_flags: <defaults>
</compile_context>

<pallas_src>
import jax
import jax.numpy as jnp
import numpy as np
from jax.experimental import pallas as pl
from jax.experimental.pallas import tpu as pltpu

_MIB = 1024 * 1024


# ----------------------------------------------------------------------------
# Tile / VMEM sizing helpers (generation aware)
# ----------------------------------------------------------------------------
def _lane_pad(n):
    return ((n + 127) // 128) * 128


def _largest_divisor_tile(n, preferred, step):
    """Largest multiple of `step` <= preferred that divides n (else full dim)."""
    t = min(preferred, n)
    t -= t % step
    while t >= step:
        if n % t == 0:
            return t
        t -= step
    return n


def _vmem_capacity_bytes():
    try:
        cap = int(getattr(pltpu.get_tpu_info(), "vmem_capacity_bytes", 0))
        if cap > 0:
            return cap
    except Exception:
        pass
    return 64 * _MIB  # conservative fallback (v7x per-core VMEM)


def _vmem_limit_bytes():
    # ~15% headroom for compiler-internal scratch:
    #   v5e/v6e (128 MiB) -> ~109 MiB scoped, v7x (64 MiB) -> ~54 MiB scoped.
    return int(_vmem_capacity_bytes() * 0.85)


def _pick_token_tile(T, per_token_bytes, fixed_bytes, budget, *, step=16, max_tm=1024):
    """Largest token tile (multiple of `step`, divisor of T) fitting `budget`,
    preferring >= 2 token tiles so the 'parallel' token axis can still shard
    across the 2 TensorCores on v7x."""
    t = min(max_tm, T)
    t -= t % step
    if t <= 0:
        return T
    best_single = None
    while t >= step:
        if T % t == 0 and fixed_bytes + t * per_token_bytes <= budget:
            if T // t >= 2:
                return t
            if best_single is None:
                best_single = t
        t -= step
    if best_single is not None:
        return best_single
    return _largest_divisor_tile(T, min(max_tm, T), 8)


def _choose_moe_tiles(T, H, I, E, x_bytes, out_bytes, w_bytes, budget):
    # Intermediate chunk: multiple of 128 dividing I, preferring >= 256 so the
    # 256-wide MXUs (v6e/v7x) are filled on the N/K dims of the two matmuls.
    ti = _largest_divisor_tile(I, min(I, 512), 128)
    # If VMEM is tight, shrink ti (never tm — tm is the weight-reuse lever).
    while ti > 128 and 4 * H * ti * w_bytes > budget // 3:
        nxt = _largest_divisor_tile(I, ti - 128, 128)
        if nxt >= ti:
            break
        ti = nxt
    fixed = 4 * H * ti * w_bytes  # double-buffered W1 + W2 blocks
    per_tok = (2 * _lane_pad(H) * x_bytes      # x block (double-buffered)
               + 2 * _lane_pad(H) * out_bytes  # output block (double-buffered)
               + _lane_pad(H) * 4              # f32 accumulator scratch
               + 2 * _lane_pad(E) * 4          # combine-weight block
               + _lane_pad(1) * 4)             # per-expert weight scratch
    tm = _pick_token_tile(T, per_tok, fixed, budget)
    return tm, ti


# ----------------------------------------------------------------------------
# Kernel 1: router (gate matmul + softmax + per-token logsumexp^2), token-parallel
# ----------------------------------------------------------------------------
def _router_kernel(x_ref, wg_ref, probs_ref, lz2_ref):
    logits = jnp.dot(x_ref[...], wg_ref[...], preferred_element_type=jnp.float32)

    # softmax over experts in float32 (matches F.softmax(..., dtype=torch.float))
    m = jnp.max(logits, axis=-1, keepdims=True)
    ex = jnp.exp(logits - m)
    s = jnp.sum(ex, axis=-1, keepdims=True)
    probs_ref[...] = ex / s

    # per-token logsumexp^2 partials; summed / normalized in the wrapper so the
    # token axis stays "parallel" (v7x megacore).
    log_z = m + jnp.log(s)
    lz2_ref[...] = log_z * log_z


def router(x_tok, gate_w, *, tm=None):
    T, H = x_tok.shape
    E = gate_w.shape[1]
    vmem_limit = _vmem_limit_bytes()
    if tm is None:
        budget = int(vmem_limit * 0.9)
        x_b = jnp.dtype(x_tok.dtype).itemsize
        per_tok = 2 * _lane_pad(H) * x_b + 2 * _lane_pad(E) * 4 + 2 * _lane_pad(1) * 4
        fixed = 2 * H * _lane_pad(E) * jnp.dtype(gate_w.dtype).itemsize
        tm = _pick_token_tile(T, per_tok, fixed, budget)
    assert T % tm == 0

    probs, lz2 = pl.pallas_call(
        _router_kernel,
        out_shape=(
            jax.ShapeDtypeStruct((T, E), jnp.float32),   # softmax probs
            jax.ShapeDtypeStruct((T, 1), jnp.float32),   # logsumexp^2 per token
        ),
        grid=(T // tm,),
        in_specs=[
            pl.BlockSpec((tm, H), lambda i: (i, 0)),
            pl.BlockSpec((H, E), lambda i: (0, 0)),      # resident gate weights
        ],
        out_specs=(
            pl.BlockSpec((tm, E), lambda i: (i, 0)),
            pl.BlockSpec((tm, 1), lambda i: (i, 0)),
        ),
        compiler_params=pltpu.CompilerParams(
            dimension_semantics=("parallel",),
            vmem_limit_bytes=vmem_limit,
        ),
    )(x_tok, gate_w)
    return probs, lz2


# ----------------------------------------------------------------------------
# Kernel 2: expert MLPs + weighted combine (the hot path)
#   grid = (token tiles, experts, intermediate chunks); f32 accumulation in a
#   VMEM scratch, single hidden-dtype HBM writeback on the last (e, c) step.
# ----------------------------------------------------------------------------
def _moe_kernel(x_ref, w1_ref, w2_ref, cw_ref, o_ref, acc_ref, we_ref):
    e = pl.program_id(1)
    c = pl.program_id(2)

    @pl.when((e == 0) & (c == 0))
    def _():
        acc_ref[...] = jnp.zeros_like(acc_ref)

    # Select this expert's combine-weight column from the lane-dense [tm, E]
    # block once per (token-tile, expert) — hoisted out of the I-chunk loop.
    @pl.when(c == 0)
    def _():
        lane = jax.lax.broadcasted_iota(jnp.int32, cw_ref.shape, 1)
        we_ref[...] = jnp.sum(jnp.where(lane == e, cw_ref[...], 0.0),
                              axis=1, keepdims=True)

    # expert_e(x) chunk: relu(x @ W1[e][:, chunk]); combine weight folded into
    # the bf16 intermediate before the second MXU pass (one cast/scale pass).
    h = jnp.dot(x_ref[...], w1_ref[...], preferred_element_type=jnp.float32)
    h = (jnp.maximum(h, 0.0) * we_ref[...]).astype(w2_ref.dtype)
    acc_ref[...] += jnp.dot(h, w2_ref[...], preferred_element_type=jnp.float32)

    @pl.when((e == pl.num_programs(1) - 1) & (c == pl.num_programs(2) - 1))
    def _():
        o_ref[...] = acc_ref[...].astype(o_ref.dtype)


def moe_experts(x_tok, w1, w2, combine_w, *, out_dtype=None, tm=None, ti=None):
    T, H = x_tok.shape
    E, _, I = w1.shape
    if out_dtype is None:
        out_dtype = x_tok.dtype

    vmem_limit = _vmem_limit_bytes()
    budget = int(vmem_limit * 0.9)
    auto_tm, auto_ti = _choose_moe_tiles(
        T, H, I, E,
        jnp.dtype(x_tok.dtype).itemsize,
        jnp.dtype(out_dtype).itemsize,
        jnp.dtype(w1.dtype).itemsize,
        budget,
    )
    tm = tm or auto_tm
    ti = ti or auto_ti
    assert T % tm == 0 and I % ti == 0
    grid = (T // tm, E, I // ti)

    return pl.pallas_call(
        _moe_kernel,
        out_shape=jax.ShapeDtypeStruct((T, H), out_dtype),
        grid_spec=pltpu.PrefetchScalarGridSpec(
            num_scalar_prefetch=0,
            grid=grid,
            in_specs=[
                pl.BlockSpec((tm, H), lambda i, e, c: (i, 0)),           # x tile (resident over e,c)
                pl.BlockSpec((None, H, ti), lambda i, e, c: (e, 0, c)),  # W1[e][:, chunk]
                pl.BlockSpec((None, ti, H), lambda i, e, c: (e, c, 0)),  # W2[e][chunk, :]
                pl.BlockSpec((tm, E), lambda i, e, c: (i, 0)),           # combine weights (resident)
            ],
            out_specs=pl.BlockSpec((tm, H), lambda i, e, c: (i, 0)),
            scratch_shapes=[
                pltpu.VMEM((tm, H), jnp.float32),   # f32 accumulator
                pltpu.VMEM((tm, 1), jnp.float32),   # per-expert combine weight
            ],
        ),
        compiler_params=pltpu.CompilerParams(
            dimension_semantics=("parallel", "arbitrary", "arbitrary"),
            vmem_limit_bytes=vmem_limit,
        ),
    )(x_tok, w1, w2, combine_w)


# ----------------------------------------------------------------------------
# Parameter preparation (cast expert weights to the MXU dtype ONCE)
# ----------------------------------------------------------------------------
def prepare_moe_params(params, compute_dtype=jnp.bfloat16):
    return {
        "gate_w": params["gate_w"],                     # router stays f32
        "w1": params["w1"].astype(compute_dtype),
        "w2": params["w2"].astype(compute_dtype),
    }


# ----------------------------------------------------------------------------
# Full DroplessMoE forward (glue in plain JAX, hot paths in Pallas)
# ----------------------------------------------------------------------------
def dropless_moe_forward(hidden_states, params, num_experts_per_token, *, tm=None, ti=None):
    B, S, H = hidden_states.shape
    E = params["gate_w"].shape[-1]
    x = hidden_states.reshape(-1, H)                    # [T, H]
    T = x.shape[0]

    # self.add_noise(...) is identity (training=False)

    # router (Pallas kernel 1)
    probs, lz2 = router(x, params["gate_w"])
    z_loss = jnp.sum(lz2) / T

    routing_weights, selected_experts = jax.lax.top_k(probs, num_experts_per_token)
    routing_weights = routing_weights / jnp.sum(routing_weights, axis=-1, keepdims=True)
    routing_weights = routing_weights.astype(hidden_states.dtype)

    # load-balancing (auxiliary) loss — tiny reductions, plain JAX
    # NOTE: tokens_per_expert [E] * router_prob_per_expert [k] is only valid
    # for k == 1 or k == E (same constraint as the original torch code).
    router_prob_per_expert = jnp.mean(routing_weights.astype(jnp.float32), axis=-2)        # [k]
    expert_mask = jnp.max(jax.nn.one_hot(selected_experts, E, dtype=jnp.int32), axis=-2)   # [T, E]
    tokens_per_expert = jnp.mean(expert_mask.astype(jnp.float32), axis=-2)                  # [E]
    aux_loss = jnp.mean(tokens_per_expert * router_prob_per_expert) * (E ** 2)

    # dense combine weights [T, E]: routing weight if expert selected, else 0
    combine_w = jnp.sum(
        jax.nn.one_hot(selected_experts, E, dtype=jnp.float32)
        * routing_weights[..., None].astype(jnp.float32),
        axis=1,
    )

    # expert MLPs + weighted combine (Pallas kernel 2); weights already bf16,
    # output emitted directly in the hidden dtype (no wrapper cast pass).
    w1, w2 = params["w1"], params["w2"]
    out = moe_experts(
        x.astype(w1.dtype), w1, w2, combine_w,
        out_dtype=hidden_states.dtype, tm=tm, ti=ti,
    )
    return out.reshape(B, S, H), aux_loss, z_loss


# ----------------------------------------------------------------------------
# Pure-JAX reference (sanity check of the kernels, f32 math)
# ----------------------------------------------------------------------------
def reference_forward(hidden_states, params, num_experts_per_token):
    B, S, H = hidden_states.shape
    E = params["gate_w"].shape[1]
    x = hidden_states.reshape(-1, H)
    logits = (x @ params["gate_w"]).astype(jnp.float32)
    probs = jax.nn.softmax(logits, axis=-1)
    rw, sel = jax.lax.top_k(probs, num_experts_per_token)
    rw = rw / jnp.sum(rw, axis=-1, keepdims=True)
    rw = rw.astype(x.dtype)
    combine_w = jnp.sum(jax.nn.one_hot(sel, E, dtype=jnp.float32) * rw[..., None], axis=1)
    out = jnp.zeros_like(x)
    for e in range(E):
        h = jnp.maximum(x @ params["w1"][e], 0.0)
        y = h @ params["w2"][e]
        out = out + y * combine_w[:, e:e + 1]
    z_loss = jnp.sum(jax.nn.logsumexp(logits, axis=-1) ** 2) / x.shape[0]
    rppe = jnp.mean(rw.astype(jnp.float32), axis=-2)
    em = jnp.max(jax.nn.one_hot(sel, E, dtype=jnp.int32), axis=-2)
    tpe = jnp.mean(em.astype(jnp.float32), axis=-2)
    aux = jnp.mean(tpe * rppe) * (E ** 2)
    return out.reshape(B, S, H), aux, z_loss


# ----------------------------------------------------------------------------
if __name__ == "__main__":
    B, S, H = 2, 256, 128
    NUM_EXPERTS = 4
    NUM_EXPERTS_PER_TOKEN = 4      # must be 1 or NUM_EXPERTS (aux-loss broadcast)
    INTERMEDIATE = 256

    key = jax.random.PRNGKey(0)
    kx, kg, k1, k2 = jax.random.split(key, 4)

    hidden_states = jax.random.normal(kx, (B, S, H), dtype=jnp.float32)
    master_params = {
        # torch nn.Linear(hidden, num_experts, bias=False).weight is [E, H];
        # stored here pre-transposed as [H, E]; expert weights as [in, out].
        "gate_w": 0.05 * jax.random.normal(kg, (H, NUM_EXPERTS), dtype=jnp.float32),
        "w1": 0.05 * jax.random.normal(k1, (NUM_EXPERTS, H, INTERMEDIATE), dtype=jnp.float32),
        "w2": 0.05 * jax.random.normal(k2, (NUM_EXPERTS, INTERMEDIATE, H), dtype=jnp.float32),
    }
    # Cast expert weights to bf16 once (not per forward call).
    run_params = prepare_moe_params(master_params, compute_dtype=jnp.bfloat16)

    # Auto tiles for this config: tm=256 (keeps 2 token tiles for megacore),
    # ti=256 (full intermediate) -> MoE grid (2, 4, 1) = 8 steps; router grid (2,).
    fwd = jax.jit(lambda hs, p: dropless_moe_forward(hs, p, NUM_EXPERTS_PER_TOKEN))
    out, aux_loss, z_loss = fwd(hidden_states, run_params)
    out = jax.block_until_ready(out)
    aux_loss = jax.block_until_ready(aux_loss)
    z_loss = jax.block_until_ready(z_loss)

    ref_out, ref_aux, ref_z = reference_forward(hidden_states, master_params, NUM_EXPERTS_PER_TOKEN)
    # bf16 MXU path vs f32 reference -> bf16-appropriate tolerances for the output.
    np.testing.assert_allclose(np.asarray(out), np.asarray(ref_out), rtol=5e-2, atol=5e-3)
    np.testing.assert_allclose(float(aux_loss), float(ref_aux), rtol=5e-3, atol=1e-4)
    np.testing.assert_allclose(float(z_loss), float(ref_z), rtol=5e-3, atol=1e-4)

    print("KERNEL_OK")
</pallas_src>

<mosaic_0001>
module attributes {stable_mosaic.version = 11 : i64} {
  func.func @_router_kernel(%arg0: i32, %arg1: memref<256x128xf32, #tpu.memory_space<vmem>>, %arg2: memref<128x4xf32, #tpu.memory_space<vmem>>, %arg3: memref<256x4xf32, #tpu.memory_space<vmem>>, %arg4: memref<256x1xf32, #tpu.memory_space<vmem>>) attributes {dimension_semantics = [#tpu.dimension_semantics<parallel>], iteration_bounds = array<i64: 2>, scalar_prefetch = 0 : i64, scratch_operands = 0 : i64, tpu.core_type = #tpu.core_type<tc>, window_params = [{transform_indices = @transform_0, window_bounds = array<i64: 256, 128>}, {pipeline_mode = #tpu.pipeline_mode<synchronous>, transform_indices = @transform_1, window_bounds = array<i64: 128, 4>}, {transform_indices = @transform_2, window_bounds = array<i64: 256, 4>}, {transform_indices = @transform_3, window_bounds = array<i64: 256, 1>}]} {
    %c0 = arith.constant 0 : index
    %c0_0 = arith.constant 0 : index
    %0 = vector.load %arg1[%c0, %c0_0] : memref<256x128xf32, #tpu.memory_space<vmem>>, vector<256x128xf32>
    %c0_1 = arith.constant 0 : index
    %c0_2 = arith.constant 0 : index
    %1 = vector.load %arg2[%c0_1, %c0_2] : memref<128x4xf32, #tpu.memory_space<vmem>>, vector<128x4xf32>
    %cst = arith.constant dense<0.000000e+00> : vector<256x4xf32>
    %2 = tpu.matmul %0, %1, %cst {dimension_numbers = #tpu.dot_dimension_numbers<[1], [0], [0], [1], [0, 0, 1, 1], [], []>} : vector<256x128xf32>, vector<128x4xf32>, vector<256x4xf32> -> vector<256x4xf32>
    %cst_3 = arith.constant dense<0xFF800000> : vector<256xf32>
    %3 = vector.multi_reduction <maximumf>, %2, %cst_3 [1] : vector<256x4xf32> to vector<256xf32>
    %4 = vector.shape_cast %3 : vector<256xf32> to vector<256x1xf32>
    %5 = vector.broadcast %4 : vector<256x1xf32> to vector<256x4xf32>
    %6 = arith.subf %2, %5 : vector<256x4xf32>
    %7 = math.exp %6 : vector<256x4xf32>
    %cst_4 = arith.constant dense<0.000000e+00> : vector<256xf32>
    %8 = vector.multi_reduction <add>, %7, %cst_4 [1] : vector<256x4xf32> to vector<256xf32>
    %9 = vector.shape_cast %8 : vector<256xf32> to vector<256x1xf32>
    %10 = vector.broadcast %9 : vector<256x1xf32> to vector<256x4xf32>
    %11 = arith.divf %7, %10 : vector<256x4xf32>
    %c0_5 = arith.constant 0 : index
    %c0_6 = arith.constant 0 : index
    %12 = vector.load %arg3[%c0_5, %c0_6] : memref<256x4xf32, #tpu.memory_space<vmem>>, vector<256x4xf32>
    tpu.vector_store %arg3[%c0_5, %c0_6], %11 {strides = array<i32>} : memref<256x4xf32, #tpu.memory_space<vmem>>, vector<256x4xf32>,
    %13 = math.log %9 : vector<256x1xf32>
    %14 = arith.addf %4, %13 : vector<256x1xf32>
    %15 = arith.mulf %14, %14 : vector<256x1xf32>
    %c0_7 = arith.constant 0 : index
    %c0_8 = arith.constant 0 : index
    %16 = vector.load %arg4[%c0_7, %c0_8] : memref<256x1xf32, #tpu.memory_space<vmem>>, vector<256x1xf32>
    tpu.vector_store %arg4[%c0_7, %c0_8], %15 {strides = array<i32>} : memref<256x1xf32, #tpu.memory_space<vmem>>, vector<256x1xf32>,
    return
  }
  func.func @transform_0(%arg0: i32) -> (i32, i32) {
    %c0_i32 = arith.constant 0 : i32
    %c0_i32_0 = arith.constant 0 : i32
    return %arg0, %c0_i32 : i32, i32
  }
  func.func @transform_1(%arg0: i32) -> (i32, i32) {
    %c0_i32 = arith.constant 0 : i32
    %c0_i32_0 = arith.constant 0 : i32
    %c0_i32_1 = arith.constant 0 : i32
    return %c0_i32, %c0_i32_0 : i32, i32
  }
  func.func @transform_2(%arg0: i32) -> (i32, i32) {
    %c0_i32 = arith.constant 0 : i32
    %c0_i32_0 = arith.constant 0 : i32
    return %arg0, %c0_i32 : i32, i32
  }
  func.func @transform_3(%arg0: i32) -> (i32, i32) {
    %c0_i32 = arith.constant 0 : i32
    %c0_i32_0 = arith.constant 0 : i32
    return %arg0, %c0_i32 : i32, i32
  }
}

module attributes {stable_mosaic.version = 11 : i64} {
  func.func @_moe_kernel(%arg0: i32, %arg1: i32, %arg2: i32, %arg3: memref<256x128xbf16, #tpu.memory_space<vmem>>, %arg4: memref<1x128x256xbf16, #tpu.memory_space<vmem>>, %arg5: memref<1x256x128xbf16, #tpu.memory_space<vmem>>, %arg6: memref<256x4xf32, #tpu.memory_space<vmem>>, %arg7: memref<256x128xf32, #tpu.memory_space<vmem>>, %arg8: memref<256x128xf32, #tpu.memory_space<vmem>>, %arg9: memref<256x1xf32, #tpu.memory_space<vmem>>) attributes {dimension_semantics = [#tpu.dimension_semantics<parallel>, #tpu.dimension_semantics<arbitrary>, #tpu.dimension_semantics<arbitrary>], iteration_bounds = array<i64: 2, 4, 1>, scalar_prefetch = 0 : i64, scratch_operands = 2 : i64, tpu.core_type = #tpu.core_type<tc>, window_params = [{transform_indices = @transform_0, window_bounds = array<i64: 256, 128>}, {transform_indices = @transform_1, window_bounds = array<i64: 1, 128, 256>}, {transform_indices = @transform_2, window_bounds = array<i64: 1, 256, 128>}, {transform_indices = @transform_3, window_bounds = array<i64: 256, 4>}, {transform_indices = @transform_4, window_bounds = array<i64: 256, 128>}]} {
    %c0_i32 = arith.constant 0 : i32
    %0 = arith.cmpi eq, %arg1, %c0_i32 : i32
    %c0_i32_0 = arith.constant 0 : i32
    %1 = arith.cmpi eq, %arg2, %c0_i32_0 : i32
    %2 = arith.andi %0, %1 : i1
    %3 = arith.extui %2 : i1 to i32
    %c0_i32_1 = arith.constant 0 : i32
    %4 = arith.cmpi ne, %3, %c0_i32_1 : i32
    scf.if %4 {
      %cst_21 = arith.constant 0.000000e+00 : f32
      %29 = vector.broadcast %cst_21 : f32 to vector<256x128xf32>
      %c0_22 = arith.constant 0 : index
      %c0_23 = arith.constant 0 : index
      %30 = vector.load %arg8[%c0_22, %c0_23] : memref<256x128xf32, #tpu.memory_space<vmem>>, vector<256x128xf32>
      tpu.vector_store %arg8[%c0_22, %c0_23], %29 {strides = array<i32>} : memref<256x128xf32, #tpu.memory_space<vmem>>, vector<256x128xf32>,
    } else {
    }
    %c0_i32_2 = arith.constant 0 : i32
    %5 = arith.cmpi eq, %arg2, %c0_i32_2 : i32
    %6 = arith.extui %5 : i1 to i32
    %c0_i32_3 = arith.constant 0 : i32
    %7 = arith.cmpi ne, %6, %c0_i32_3 : i32
    scf.if %7 {
      %29 = tpu.iota {dimensions = array<i32: 1>} : vector<256x4xi32>
      %30 = vector.broadcast %arg1 : i32 to vector<256x4xi32>
      %31 = arith.cmpi eq, %29, %30 : vector<256x4xi32>
      %c0_21 = arith.constant 0 : index
      %c0_22 = arith.constant 0 : index
      %32 = vector.load %arg6[%c0_21, %c0_22] : memref<256x4xf32, #tpu.memory_space<vmem>>, vector<256x4xf32>
      %cst_23 = arith.constant 0.000000e+00 : f32
      %33 = vector.broadcast %cst_23 : f32 to vector<256x4xf32>
      %34 = arith.select %31, %32, %33 : vector<256x4xi1>, vector<256x4xf32>
      %cst_24 = arith.constant dense<0.000000e+00> : vector<256xf32>
      %35 = vector.multi_reduction <add>, %34, %cst_24 [1] : vector<256x4xf32> to vector<256xf32>
      %36 = vector.shape_cast %35 : vector<256xf32> to vector<256x1xf32>
      %c0_25 = arith.constant 0 : index
      %c0_26 = arith.constant 0 : index
      %37 = vector.load %arg9[%c0_25, %c0_26] : memref<256x1xf32, #tpu.memory_space<vmem>>, vector<256x1xf32>
      tpu.vector_store %arg9[%c0_25, %c0_26], %36 {strides = array<i32>} : memref<256x1xf32, #tpu.memory_space<vmem>>, vector<256x1xf32>,
    } else {
    }
    %c0 = arith.constant 0 : index
    %c0_4 = arith.constant 0 : index
    %8 = vector.load %arg3[%c0, %c0_4] : memref<256x128xbf16, #tpu.memory_space<vmem>>, vector<256x128xbf16>
    %c0_5 = arith.constant 0 : index
    %c0_6 = arith.constant 0 : index
    %c0_7 = arith.constant 0 : index
    %9 = vector.load %arg4[%c0_5, %c0_6, %c0_7] : memref<1x128x256xbf16, #tpu.memory_space<vmem>>, vector<1x128x256xbf16>
    %10 = vector.shape_cast %9 : vector<1x128x256xbf16> to vector<128x256xbf16>
    %cst = arith.constant dense<0.000000e+00> : vector<256x256xf32>
    %11 = tpu.matmul %8, %10, %cst {dimension_numbers = #tpu.dot_dimension_numbers<[1], [0], [0], [1], [0, 0, 1, 1], [], []>} : vector<256x128xbf16>, vector<128x256xbf16>, vector<256x256xf32> -> vector<256x256xf32>
    %cst_8 = arith.constant 0.000000e+00 : f32
    %12 = vector.broadcast %cst_8 : f32 to vector<256x256xf32>
    %13 = arith.maximumf %11, %12 : vector<256x256xf32>
    %c0_9 = arith.constant 0 : index
    %c0_10 = arith.constant 0 : index
    %14 = vector.load %arg9[%c0_9, %c0_10] : memref<256x1xf32, #tpu.memory_space<vmem>>, vector<256x1xf32>
    %15 = vector.broadcast %14 : vector<256x1xf32> to vector<256x256xf32>
    %16 = arith.mulf %13, %15 : vector<256x256xf32>
    %17 = arith.truncf %16 : vector<256x256xf32> to vector<256x256xbf16>
    %c0_11 = arith.constant 0 : index
    %c0_12 = arith.constant 0 : index
    %18 = vector.load %arg8[%c0_11, %c0_12] : memref<256x128xf32, #tpu.memory_space<vmem>>, vector<256x128xf32>
    %c0_13 = arith.constant 0 : index
    %c0_14 = arith.constant 0 : index
    %c0_15 = arith.constant 0 : index
    %19 = vector.load %arg5[%c0_13, %c0_14, %c0_15] : memref<1x256x128xbf16, #tpu.memory_space<vmem>>, vector<1x256x128xbf16>
    %20 = vector.shape_cast %19 : vector<1x256x128xbf16> to vector<256x128xbf16>
    %cst_16 = arith.constant dense<0.000000e+00> : vector<256x128xf32>
    %21 = tpu.matmul %17, %20, %cst_16 {dimension_numbers = #tpu.dot_dimension_numbers<[1], [0], [0], [1], [0, 0, 1, 1], [], []>} : vector<256x256xbf16>, vector<256x128xbf16>, vector<256x128xf32> -> vector<256x128xf32>
    %22 = arith.addf %18, %21 : vector<256x128xf32>
    %c0_17 = arith.constant 0 : index
    %c0_18 = arith.constant 0 : index
    %23 = vector.load %arg8[%c0_17, %c0_18] : memref<256x128xf32, #tpu.memory_space<vmem>>, vector<256x128xf32>
    tpu.vector_store %arg8[%c0_17, %c0_18], %22 {strides = array<i32>} : memref<256x128xf32, #tpu.memory_space<vmem>>, vector<256x128xf32>,
    %c3_i32 = arith.constant 3 : i32
    %24 = arith.cmpi eq, %arg1, %c3_i32 : i32
    %c0_i32_19 = arith.constant 0 : i32
    %25 = arith.cmpi eq, %arg2, %c0_i32_19 : i32
    %26 = arith.andi %24, %25 : i1
    %27 = arith.extui %26 : i1 to i32
    %c0_i32_20 = arith.constant 0 : i32
    %28 = arith.cmpi ne, %27, %c0_i32_20 : i32
    scf.if %28 {
      %c0_21 = arith.constant 0 : index
      %c0_22 = arith.constant 0 : index
      %29 = vector.load %arg8[%c0_21, %c0_22] : memref<256x128xf32, #tpu.memory_space<vmem>>, vector<256x128xf32>
      %c0_23 = arith.constant 0 : index
      %c0_24 = arith.constant 0 : index
      %30 = vector.load %arg7[%c0_23, %c0_24] : memref<256x128xf32, #tpu.memory_space<vmem>>, vector<256x128xf32>
      tpu.vector_store %arg7[%c0_23, %c0_24], %29 {strides = array<i32>} : memref<256x128xf32, #tpu.memory_space<vmem>>, vector<256x128xf32>,
    } else {
    }
    return
  }
  func.func @transform_0(%arg0: i32, %arg1: i32, %arg2: i32) -> (i32, i32) {
    %c0_i32 = arith.constant 0 : i32
    %c0_i32_0 = arith.constant 0 : i32
    return %arg0, %c0_i32 : i32, i32
  }
  func.func @transform_1(%arg0: i32, %arg1: i32, %arg2: i32) -> (i32, i32, i32) {
    %c0_i32 = arith.constant 0 : i32
    %c0_i32_0 = arith.constant 0 : i32
    return %arg1, %c0_i32, %arg2 : i32, i32, i32
  }
  func.func @transform_2(%arg0: i32, %arg1: i32, %arg2: i32) -> (i32, i32, i32) {
    %c0_i32 = arith.constant 0 : i32
    %c0_i32_0 = arith.constant 0 : i32
    return %arg1, %arg2, %c0_i32 : i32, i32, i32
  }
  func.func @transform_3(%arg0: i32, %arg1: i32, %arg2: i32) -> (i32, i32) {
    %c0_i32 = arith.constant 0 : i32
    %c0_i32_0 = arith.constant 0 : i32
    return %arg0, %c0_i32 : i32, i32
  }
  func.func @transform_4(%arg0: i32, %arg1: i32, %arg2: i32) -> (i32, i32) {
    %c0_i32 = arith.constant 0 : i32
    %c0_i32_0 = arith.constant 0 : i32
    return %arg0, %c0_i32 : i32, i32
  }
}

</mosaic_0001>

<llo_original>
// kernel: _lambda_.2
$region0: #{_lambda_.2}
  #allocation0 [shape = 'u32[]', space=smem, size = 0x4, offset = 0x4, fixed_abs, tag = 'smem constant byte address 0x4 - core index']
  #allocation1 [shape = 'u32[144,128]{1,0:T(1,128)}', space=vmem, size = 0x12000, scoped, tag = 'internal scratch']
  %s0 = inlined_call_operand.vmem [shape: f32[512,128], index: 0, kind: input, shape index: {}]
  %s1 = inlined_call_operand.vmem [shape: f32[128,4], index: 1, kind: input, shape index: {}]
  %s2 = inlined_call_operand.vmem [shape: f32[512,4], index: 2, kind: output, shape index: {0}]
  %s3 = inlined_call_operand.vmem [shape: f32[512,1], index: 3, kind: output, shape index: {1}]
  %4 = xla_tuple %s2, %s3
  %s5 = sld [smem:[#allocation0]]
  $region49: #{_lambda_.2} parent=0
    _
  %s7 = ssub.s32 1, %s5
  %s8 = scalar_select 0, %s7, %s5
  loop: start=0, step=1, limit=4
  $region2: #{_lambda_.2} parent=0 // loop_pre_header
    _
  $region3: #{_lambda_.2} parent=0 // loop_header
    %s10 = sphi 0, %s14
    %p11 = scmp.ge.s32.totalorder %s10, 4
    %s20 = sphi 0, %s22
    %s23 = sphi 0, %s20
    %s24 = sphi 0, %s23
    %s40 = sphi 0, %s24
    %s44 = sphi 0, %s44
    %s46 = sphi 0, %s44
    %s47 = sphi 0, %s46
    %s61 = sphi 0, %s47
    %s67 = sphi 0, %s69
    %s70 = sphi 0, %s67
    %s71 = sphi 0, %s70
    %s87 = sphi 0, %s71
    %s93 = sphi 0, %s95
    %s96 = sphi 0, %s93
    %s97 = sphi 0, %s96
    %s113 = sphi 0, %s97
  $region4: #{_lambda_.2} parent=0 // loop_header_branch
    %13 = sbr.rel (%p11) target = $region8
  $region5: #{_lambda_.2} parent=0 // loop_body
    %s15 = ssub.s32 %s10, 1
    %s16 = ssub.s32 %s10, 2
    %s17 = sadd.s32 %s10, 1
    %s18 = ssub.s32 %s10, %s17
    %p19 = scmp.eq.s32.totalorder %s18, 0
    %s21 = sadd.s32 %s20, 1
    %s22 = scalar_select %p19, %s20, %s21
    %p25 = pneg %p19
    %p26 = scmp.eq.s32.totalorder %s10, 1
    %p27 = por %p25, %p26
    %p28 = scmp.ne.s32.totalorder %s20, %s23
    %p29 = scmp.eq.s32.totalorder %s10, 0
    %p30 = por %p28, %p29
    %p31 = scmp.ne.s32.totalorder %s20, %s23
    %p32 = scmp.eq.s32.totalorder %s15, 1
    %p33 = por %p31, %p32
    %p34 = scmp.ne.s32.totalorder %s23, %s24
    %p35 = scmp.eq.s32.totalorder %s15, 0
    %p36 = por %p34, %p35
    %p37 = scmp.ne.s32.totalorder %s23, %s24
    %p38 = scmp.eq.s32.totalorder %s16, 1
    %p39 = por %p37, %p38
    %p41 = scmp.ne.s32.totalorder %s24, %s40
    %p42 = scmp.eq.s32.totalorder %s16, 0
    %p43 = por %p41, %p42
    %s45 = sadd.s32 %s44, 1
    %p48 = scmp.eq.s32.totalorder %s10, 1
    %p49 = scmp.ne.s32.totalorder %s44, %s46
    %p50 = scmp.eq.s32.totalorder %s10, 0
    %p51 = por %p49, %p50
    %p52 = scmp.ne.s32.totalorder %s44, %s46
    %p53 = scmp.eq.s32.totalorder %s15, 1
    %p54 = por %p52, %p53
    %p55 = scmp.ne.s32.totalorder %s46, %s47
    %p56 = scmp.eq.s32.totalorder %s15, 0
    %p57 = por %p55, %p56
    %p58 = scmp.ne.s32.totalorder %s46, %s47
    %p59 = scmp.eq.s32.totalorder %s16, 1
    %p60 = por %p58, %p59
    %p62 = scmp.ne.s32.totalorder %s47, %s61
    %p63 = scmp.eq.s32.totalorder %s16, 0
    %p64 = por %p62, %p63
    %s65 = ssub.s32 %s10, %s17
    %p66 = scmp.eq.s32.totalorder %s65, 0
    %s68 = sadd.s32 %s67, 1
    %s69 = scalar_select %p66, %s67, %s68
    %p72 = pneg %p66
    %p73 = scmp.eq.s32.totalorder %s10, 1
    %p74 = por %p72, %p73
    %p75 = scmp.ne.s32.totalorder %s67, %s70
    %p76 = scmp.eq.s32.totalorder %s10, 0
    %p77 = por %p75, %p76
    %p78 = scmp.ne.s32.totalorder %s67, %s70
    %p79 = scmp.eq.s32.totalorder %s15, 1
    %p80 = por %p78, %p79
    %p81 = scmp.ne.s32.totalorder %s70, %s71
    %p82 = scmp.eq.s32.totalorder %s15, 0
    %p83 = por %p81, %p82
    %p84 = scmp.ne.s32.totalorder %s70, %s71
    %p85 = scmp.eq.s32.totalorder %s16, 1
    %p86 = por %p84, %p85
    %p88 = scmp.ne.s32.totalorder %s71, %s87
    %p89 = scmp.eq.s32.totalorder %s16, 0
    %p90 = por %p88, %p89
    %s91 = ssub.s32 %s10, %s17
    %p92 = scmp.eq.s32.totalorder %s91, 0
    %s94 = sadd.s32 %s93, 1
    %s95 = scalar_select %p92, %s93, %s94
    %p98 = pneg %p92
    %p99 = scmp.eq.s32.totalorder %s10, 1
    %p100 = por %p98, %p99
    %p101 = scmp.ne.s32.totalorder %s93, %s96
    %p102 = scmp.eq.s32.totalorder %s10, 0
    %p103 = por %p101, %p102
    %p104 = scmp.ne.s32.totalorder %s93, %s96
    %p105 = scmp.eq.s32.totalorder %s15, 1
    %p106 = por %p104, %p105
    %p107 = scmp.ne.s32.totalorder %s96, %s97
    %p108 = scmp.eq.s32.totalorder %s15, 0
    %p109 = por %p107, %p108
    %p110 = scmp.ne.s32.totalorder %s96, %s97
    %p111 = scmp.eq.s32.totalorder %s16, 1
    %p112 = por %p110, %p111
    %p114 = scmp.ne.s32.totalorder %s97, %s113
    %p115 = scmp.eq.s32.totalorder %s16, 0
    %p116 = por %p114, %p115
    %p117 = scmp.le.s32.totalorder 1, %s10
    %p118 = scmp.lt.s32.totalorder %s10, 3
    %p119 = pnand %p117, %p118
    %p120 = pneg %p119
    // Predicated region
    $region9: #{_lambda_.2} parent=5 // pred_check
      _
    $region10: #{_lambda_.2} parent=5 // pred_check_branch
      %122 = sbr.rel (%p119) target = $region12
    $region11: #{_lambda_.2} parent=5 // pred_region
      %s123 = ssub.s32 %s10, 1
      // Predicated region
      $region13: #{_lambda_.2} parent=11 // pred_check
        %p124 = pneg %p57
      $region14: #{_lambda_.2} parent=11 // pred_check_branch
        %126 = sbr.rel (%p124) target = $region16
      $region15: #{_lambda_.2} parent=11 // pred_region
        _
      $region16: #{_lambda_.2} parent=11 // pred_fallthru
        _
    $region12: #{_lambda_.2} parent=5 // pred_fallthru
      _
    %p127 = scmp.lt.s32.totalorder %s10, 2
    // Predicated region
    $region17: #{_lambda_.2} parent=5 // pred_check
      %p128 = pneg %p127
    $region18: #{_lambda_.2} parent=5 // pred_check_branch
      %130 = sbr.rel (%p128) target = $region20
    $region19: #{_lambda_.2} parent=5 // pred_region
      // Predicated region
      $region21: #{_lambda_.2} parent=19 // pred_check
        %p131 = pneg %p30
      $region22: #{_lambda_.2} parent=19 // pred_check_branch
        %133 = sbr.rel (%p131) target = $region24
      $region23: #{_lambda_.2} parent=19 // pred_region
        %s134 = smul.u32 32, %s10
        %p135 = scmp.lt.s32.totalorder %s134, 63
        %s136 = scalar_select %p135, %s134, 63
        %s137 = smul.addr %s136, 8
        %s138 = scalar_lea.vmem %s0, %s137
        %s139 = smul.u32 32, %s10
      $region24: #{_lambda_.2} parent=19 // pred_fallthru
        _
    $region20: #{_lambda_.2} parent=5 // pred_fallthru
      _
    %p140 = scmp.le.s32.totalorder 1, %s10
    %p141 = scmp.lt.s32.totalorder %s10, 3
    %p142 = pnand %p140, %p141
    %p143 = pneg %p142
    // Predicated region
    $region25: #{_lambda_.2} parent=5 // pred_check
      _
    $region26: #{_lambda_.2} parent=5 // pred_check_branch
      %145 = sbr.rel (%p142) target = $region28
    $region27: #{_lambda_.2} parent=5 // pred_region
      %s146 = ssub.s32 %s10, 1
      %s147 = smul.u32 32, %s15
      %p148 = scmp.lt.s32.totalorder %s147, 63
      %s149 = scalar_select %p148, %s147, 63
      %s150 = smul.addr %s149, 8
      %s151 = scalar_lea.vmem %s0, %s150
      %p152 = pneg %p36
      %p153 = pneg %p33
      %p154 = pneg %p57
      %p155 = pneg %p54
      %p156 = pneg %p83
      %p157 = pneg %p80
      %s158 = smul.u32 32, %s15
      %p159 = scmp.lt.s32.totalorder %s158, 63
      %s160 = scalar_select %p159, %s158, 63
      %s161 = smul.addr %s160, 8
      %s162 = scalar_lea.vmem %s2, %s161
      %p163 = pneg %p109
      %p164 = pneg %p106
      %s165 = smul.u32 32, %s15
      %p166 = scmp.lt.s32.totalorder %s165, 63
      %s167 = scalar_select %p166, %s165, 63
      %s168 = smul.addr %s167, 8
      %s169 = scalar_lea.vmem %s3, %s168
      %s170 = smul.u32 32, %s15
      %p171 = scmp.lt.s32.totalorder %s170, 63
      %s172 = scalar_select %p171, %s170, 63
      %s173 = smul.addr %s172, 8
      %s174 = scalar_lea.vmem %s0, %s173
      %s175 = smul.u32 32, %s15
      %s176 = smul.u32 32, %s15
      %p177 = scmp.lt.s32.totalorder %s176, 63
      %s178 = scalar_select %p177, %s176, 63
      %s179 = smul.addr %s178, 8
      %s180 = scalar_lea.vmem %s2, %s179
      %s181 = smul.u32 32, %s15
      %s182 = smul.u32 32, %s15
      %p183 = scmp.lt.s32.totalorder %s182, 63
      %s184 = scalar_select %p183, %s182, 63
      %s185 = smul.addr %s184, 8
      %s186 = scalar_lea.vmem %s3, %s185
      %s187 = smul.u32 32, %s15
      %v188 = vld [vmem:[%s174] sm:$0xff]
      %v189 = vld [vmem:[%s174 + $0x8] sm:$0xff]
      %v190 = vld [vmem:[%s174 + $0x10] sm:$0xff]
      %v191 = vld [vmem:[%s174 + $0x18] sm:$0xff]
      %v192 = vld [vmem:[%s174 + $0x20] sm:$0xff]
      %v193 = vld [vmem:[%s174 + $0x28] sm:$0xff]
      %v194 = vld [vmem:[%s174 + $0x30] sm:$0xff]
      %v195 = vld [vmem:[%s174 + $0x38] sm:$0xff]
      %v196 = vld [vmem:[%s174 + $0x40] sm:$0xff]
      %v197 = vld [vmem:[%s174 + $0x48] sm:$0xff]
      %v198 = vld [vmem:[%s174 + $0x50] sm:$0xff]
      %v199 = vld [vmem:[%s174 + $0x58] sm:$0xff]
      %v200 = vld [vmem:[%s174 + $0x60] sm:$0xff]
      %v201 = vld [vmem:[%s174 + $0x68] sm:$0xff]
      %v202 = vld [vmem:[%s174 + $0x70] sm:$0xff]
      %v203 = vld [vmem:[%s174 + $0x78] sm:$0xff]
      %v204 = vld [vmem:[%s174 + $0x80] sm:$0xff]
      %v205 = vld [vmem:[%s174 + $0x88] sm:$0xff]
      %v206 = vld [vmem:[%s174 + $0x90] sm:$0xff]
      %v207 = vld [vmem:[%s174 + $0x98] sm:$0xff]
      %v208 = vld [vmem:[%s174 + $0xa0] sm:$0xff]
      %v209 = vld [vmem:[%s174 + $0xa8] sm:$0xff]
      %v210 = vld [vmem:[%s174 + $0xb0] sm:$0xff]
      %v211 = vld [vmem:[%s174 + $0xb8] sm:$0xff]
      %v212 = vld [vmem:[%s174 + $0xc0] sm:$0xff]
      %v213 = vld [vmem:[%s174 + $0xc8] sm:$0xff]
      %v214 = vld [vmem:[%s174 + $0xd0] sm:$0xff]
      %v215 = vld [vmem:[%s174 + $0xd8] sm:$0xff]
      %v216 = vld [vmem:[%s174 + $0xe0] sm:$0xff]
      %v217 = vld [vmem:[%s174 + $0xe8] sm:$0xff]
      %v218 = vld [vmem:[%s174 + $0xf0] sm:$0xff]
      %v219 = vld [vmem:[%s174 + $0xf8] sm:$0xff]
      %v220 = vld [vmem:[%s1] sm:$0xff]
      %v221 = vld [vmem:[%s1 + $0x8] sm:$0xff]
      %v222 = vld [vmem:[%s1 + $0x10] sm:$0xff]
      %v223 = vld [vmem:[%s1 + $0x18] sm:$0xff]
      %v224 = vld [vmem:[%s1 + $0x20] sm:$0xff]
      %v225 = vld [vmem:[%s1 + $0x28] sm:$0xff]
      %v226 = vld [vmem:[%s1 + $0x30] sm:$0xff]
      %v227 = vld [vmem:[%s1 + $0x38] sm:$0xff]
      %v228 = vld [vmem:[%s1 + $0x40] sm:$0xff]
      %v229 = vld [vmem:[%s1 + $0x48] sm:$0xff]
      %v230 = vld [vmem:[%s1 + $0x50] sm:$0xff]
      %v231 = vld [vmem:[%s1 + $0x58] sm:$0xff]
      %v232 = vld [vmem:[%s1 + $0x60] sm:$0xff]
      %v233 = vld [vmem:[%s1 + $0x68] sm:$0xff]
      %v234 = vld [vmem:[%s1 + $0x70] sm:$0xff]
      %v235 = vld [vmem:[%s1 + $0x78] sm:$0xff]
      %236 = vmatprep.subr.mxu0 0.0
      %237 = vmatpush1.msra.mxu0 %v220
      %238 = vmatprep.subr.mxu0 0.0
      %239 = vmatpush1.msra.mxu0 %v221
      %240 = vmatprep.subr.mxu0 0.0
      %241 = vmatpush1.msra.mxu0 %v222
      %242 = vmatprep.subr.mxu0 0.0
      %243 = vmatpush1.msra.mxu0 %v223
      %244 = vmatprep.subr.mxu0 0.0
      %245 = vmatpush1.msra.mxu0 %v224
      %246 = vmatprep.subr.mxu0 0.0
      %247 = vmatpush1.msra.mxu0 %v225
      %248 = vmatprep.subr.mxu0 0.0
      %249 = vmatpush1.msra.mxu0 %v226
      %250 = vmatprep.subr.mxu0 0.0
      %251 = vmatpush1.msra.mxu0 %v227
      %252 = vmatprep.subr.mxu0 0.0
      %253 = vmatpush1.msra.mxu0 %v228
      %254 = vmatprep.subr.mxu0 0.0
      %255 = vmatpush1.msra.mxu0 %v229
      %256 = vmatprep.subr.mxu0 0.0
      %257 = vmatpush1.msra.mxu0 %v230
      %258 = vmatprep.subr.mxu0 0.0
      %259 = vmatpush1.msra.mxu0 %v231
      %260 = vmatprep.subr.mxu0 0.0
      %261 = vmatpush1.msra.mxu0 %v232
      %262 = vmatprep.subr.mxu0 0.0
      %263 = vmatpush1.msra.mxu0 %v233
      %264 = vmatprep.subr.mxu0 0.0
      %265 = vmatpush1.msra.mxu0 %v234
      %266 = vmatprep.subr.mxu0 0.0
      %267 = vmatpush1.msra.mxu0 %v235
      %268 = vmatprep.subr.mxu0 0.0
      %269 = vmatpush1.msra.mxu0 0.0
      %270 = vmatprep.subr.mxu0 0.0
      %271 = vmatpush1.msra.mxu0 0.0
      %272 = vmatprep.subr.mxu0 0.0
      %273 = vmatpush1.msra.mxu0 0.0
      %274 = vmatprep.subr.mxu0 0.0
      %275 = vmatpush1.msra.mxu0 0.0
      %276 = vmatprep.subr.mxu0 0.0
      %277 = vmatpush1.msra.mxu0 0.0
      %278 = vmatprep.subr.mxu0 0.0
      %279 = vmatpush1.msra.mxu0 0.0
      %280 = vmatprep.subr.mxu0 0.0
      %281 = vmatpush1.msra.mxu0 0.0
      %282 = vmatprep.subr.mxu0 0.0
      %283 = vmatpush1.msra.mxu0 0.0
      %284 = vmatprep.subr.mxu0 0.0
      %285 = vmatpush1.msra.mxu0 0.0
      %286 = vmatprep.subr.mxu0 0.0
      %287 = vmatpush1.msra.mxu0 0.0
      %288 = vmatprep.subr.mxu0 0.0
      %289 = vmatpush1.msra.mxu0 0.0
      %290 = vmatprep.subr.mxu0 0.0
      %291 = vmatpush1.msra.mxu0 0.0
      %292 = vmatprep.subr.mxu0 0.0
      %293 = vmatpush1.msra.mxu0 0.0
      %294 = vmatprep.subr.mxu0 0.0
      %295 = vmatpush1.msra.mxu0 0.0
      %296 = vmatprep.subr.mxu0 0.0
      %297 = vmatpush1.msra.mxu0 0.0
      %298 = vmatprep.subr.mxu0 0.0
      %299 = vmatpush1.msra.mxu0 0.0
      %300 = vmatprep.mubr.f32.mxu0 0.0
      %301 = vmatmul.mubr.f32.gmra.mrb[0].mxu0 %v188
      %v302 = vpop.f32.mrb[0].mxu0
      %v303 = vadd.f32 0.0, %v302
      %v304 = vpop.f32.mrb[0].mxu0
      %305 = vmatprep.mubr.f32.mxu0 0.0
      %306 = vmatmul.mubr.f32.gmra.mrb[0].mxu0 %v189
      %v307 = vpop.f32.mrb[0].mxu0
      %v308 = vadd.f32 0.0, %v307
      %v309 = vpop.f32.mrb[0].mxu0
      %310 = vmatprep.mubr.f32.mxu0 0.0
      %311 = vmatmul.mubr.f32.gmra.mrb[0].mxu0 %v190
      %v312 = vpop.f32.mrb[0].mxu0
      %v313 = vadd.f32 0.0, %v312
      %v314 = vpop.f32.mrb[0].mxu0
      %315 = vmatprep.mubr.f32.mxu0 0.0
      %316 = vmatmul.mubr.f32.gmra.mrb[0].mxu0 %v191
      %v317 = vpop.f32.mrb[0].mxu0
      %v318 = vadd.f32 0.0, %v317
      %v319 = vpop.f32.mrb[0].mxu0
      %320 = vmatprep.mubr.f32.mxu0 0.0
      %321 = vmatmul.mubr.f32.gmra.mrb[0].mxu0 %v192
      %v322 = vpop.f32.mrb[0].mxu0
      %v323 = vadd.f32 0.0, %v322
      %v324 = vpop.f32.mrb[0].mxu0
      %325 = vmatprep.mubr.f32.mxu0 0.0
      %326 = vmatmul.mubr.f32.gmra.mrb[0].mxu0 %v193
      %v327 = vpop.f32.mrb[0].mxu0
      %v328 = vadd.f32 0.0, %v327
      %v329 = vpop.f32.mrb[0].mxu0
      %330 = vmatprep.mubr.f32.mxu0 0.0
      %331 = vmatmul.mubr.f32.gmra.mrb[0].mxu0 %v194
      %v332 = vpop.f32.mrb[0].mxu0
      %v333 = vadd.f32 0.0, %v332
      %v334 = vpop.f32.mrb[0].mxu0
      %335 = vmatprep.mubr.f32.mxu0 0.0
      %336 = vmatmul.mubr.f32.gmra.mrb[0].mxu0 %v195
      %v337 = vpop.f32.mrb[0].mxu0
      %v338 = vadd.f32 0.0, %v337
      %v339 = vpop.f32.mrb[0].mxu0
      %340 = vmatprep.mubr.f32.mxu0 0.0
      %341 = vmatmul.mubr.f32.gmra.mrb[0].mxu0 %v196
      %v342 = vpop.f32.mrb[0].mxu0
      %v343 = vadd.f32 0.0, %v342
      %v344 = vpop.f32.mrb[0].mxu0
      %345 = vmatprep.mubr.f32.mxu0 0.0
      %346 = vmatmul.mubr.f32.gmra.mrb[0].mxu0 %v197
      %v347 = vpop.f32.mrb[0].mxu0
      %v348 = vadd.f32 0.0, %v347
      %v349 = vpop.f32.mrb[0].mxu0
      %350 = vmatprep.mubr.f32.mxu0 0.0
      %351 = vmatmul.mubr.f32.gmra.mrb[0].mxu0 %v198
      %v352 = vpop.f32.mrb[0].mxu0
      %v353 = vadd.f32 0.0, %v352
      %v354 = vpop.f32.mrb[0].mxu0
      %355 = vmatprep.mubr.f32.mxu0 0.0
      %356 = vmatmul.mubr.f32.gmra.mrb[0].mxu0 %v199
      %v357 = vpop.f32.mrb[0].mxu0
      %v358 = vadd.f32 0.0, %v357
      %v359 = vpop.f32.mrb[0].mxu0
      %360 = vmatprep.mubr.f32.mxu0 0.0
      %361 = vmatmul.mubr.f32.gmra.mrb[0].mxu0 %v200
      %v362 = vpop.f32.mrb[0].mxu0
      %v363 = vadd.f32 0.0, %v362
      %v364 = vpop.f32.mrb[0].mxu0
      %365 = vmatprep.mubr.f32.mxu0 0.0
      %366 = vmatmul.mubr.f32.gmra.mrb[0].mxu0 %v201
      %v367 = vpop.f32.mrb[0].mxu0
      %v368 = vadd.f32 0.0, %v367
      %v369 = vpop.f32.mrb[0].mxu0
      %370 = vmatprep.mubr.f32.mxu0 0.0
      %371 = vmatmul.mubr.f32.gmra.mrb[0].mxu0 %v202
      %v372 = vpop.f32.mrb[0].mxu0
      %v373 = vadd.f32 0.0, %v372
      %v374 = vpop.f32.mrb[0].mxu0
      %375 = vmatprep.mubr.f32.mxu0 0.0
      %376 = vmatmul.mubr.f32.gmra.mrb[0].mxu0 %v203
      %v377 = vpop.f32.mrb[0].mxu0
      %v378 = vadd.f32 0.0, %v377
      %v379 = vpop.f32.mrb[0].mxu0
      %380 = vmatprep.mubr.f32.mxu0 0.0
      %381 = vmatmul.mubr.f32.gmra.mrb[0].mxu0 %v204
      %v382 = vpop.f32.mrb[0].mxu0
      %v383 = vadd.f32 0.0, %v382
      %v384 = vpop.f32.mrb[0].mxu0
      %385 = vmatprep.mubr.f32.mxu0 0.0
      %386 = vmatmul.mubr.f32.gmra.mrb[0].mxu0 %v205
      %v387 = vpop.f32.mrb[0].mxu0
      %v388 = vadd.f32 0.0, %v387
      %v389 = vpop.f32.mrb[0].mxu0
      %390 = vmatprep.mubr.f32.mxu0 0.0
      %391 = vmatmul.mubr.f32.gmra.mrb[0].mxu0 %v206
      %v392 = vpop.f32.mrb[0].mxu0
      %v393 = vadd.f32 0.0, %v392
      %v394 = vpop.f32.mrb[0].mxu0
      %395 = vmatprep.mubr.f32.mxu0 0.0
      %396 = vmatmul.mubr.f32.gmra.mrb[0].mxu0 %v207
      %v397 = vpop.f32.mrb[0].mxu0
      %v398 = vadd.f32 0.0, %v397
      %v399 = vpop.f32.mrb[0].mxu0
      %400 = vmatprep.mubr.f32.mxu0 0.0
      %401 = vmatmul.mubr.f32.gmra.mrb[0].mxu0 %v208
      %v402 = vpop.f32.mrb[0].mxu0
      %v403 = vadd.f32 0.0, %v402
      %v404 = vpop.f32.mrb[0].mxu0
      %405 = vmatprep.mubr.f32.mxu0 0.0
      %406 = vmatmul.mubr.f32.gmra.mrb[0].mxu0 %v209
      %v407 = vpop.f32.mrb[0].mxu0
      %v408 = vadd.f32 0.0, %v407
      %v409 = vpop.f32.mrb[0].mxu0
      %410 = vmatprep.mubr.f32.mxu0 0.0
      %411 = vmatmul.mubr.f32.gmra.mrb[0].mxu0 %v210
      %v412 = vpop.f32.mrb[0].mxu0
      %v413 = vadd.f32 0.0, %v412
      %v414 = vpop.f32.mrb[0].mxu0
      %415 = vmatprep.mubr.f32.mxu0 0.0
      %416 = vmatmul.mubr.f32.gmra.mrb[0].mxu0 %v211
      %v417 = vpop.f32.mrb[0].mxu0
      %v418 = vadd.f32 0.0, %v417
      %v419 = vpop.f32.mrb[0].mxu0
      %420 = vmatprep.mubr.f32.mxu0 0.0
      %421 = vmatmul.mubr.f32.gmra.mrb[0].mxu0 %v212
      %v422 = vpop.f32.mrb[0].mxu0
      %v423 = vadd.f32 0.0, %v422
      %v424 = vpop.f32.mrb[0].mxu0
      %425 = vmatprep.mubr.f32.mxu0 0.0
      %426 = vmatmul.mubr.f32.gmra.mrb[0].mxu0 %v213
      %v427 = vpop.f32.mrb[0].mxu0
      %v428 = vadd.f32 0.0, %v427
      %v429 = vpop.f32.mrb[0].mxu0
      %430 = vmatprep.mubr.f32.mxu0 0.0
      %431 = vmatmul.mubr.f32.gmra.mrb[0].mxu0 %v214
      %v432 = vpop.f32.mrb[0].mxu0
      %v433 = vadd.f32 0.0, %v432
      %v434 = vpop.f32.mrb[0].mxu0
      %435 = vmatprep.mubr.f32.mxu0 0.0
      %436 = vmatmul.mubr.f32.gmra.mrb[0].mxu0 %v215
      %v437 = vpop.f32.mrb[0].mxu0
      %v438 = vadd.f32 0.0, %v437
      %v439 = vpop.f32.mrb[0].mxu0
      %440 = vmatprep.mubr.f32.mxu0 0.0
      %441 = vmatmul.mubr.f32.gmra.mrb[0].mxu0 %v216
      %v442 = vpop.f32.mrb[0].mxu0
      %v443 = vadd.f32 0.0, %v442
      %v444 = vpop.f32.mrb[0].mxu0
      %445 = vmatprep.mubr.f32.mxu0 0.0
      %446 = vmatmul.mubr.f32.gmra.mrb[0].mxu0 %v217
      %v447 = vpop.f32.mrb[0].mxu0
      %v448 = vadd.f32 0.0, %v447
      %v449 = vpop.f32.mrb[0].mxu0
      %450 = vmatprep.mubr.f32.mxu0 0.0
      %451 = vmatmul.mubr.f32.gmra.mrb[0].mxu0 %v218
      %v452 = vpop.f32.mrb[0].mxu0
      %v453 = vadd.f32 0.0, %v452
      %v454 = vpop.f32.mrb[0].mxu0
      %455 = vmatprep.mubr.f32.mxu0 0.0
      %456 = vmatmul.mubr.f32.gmra.mrb[0].mxu0 %v219
      %v457 = vpop.f32.mrb[0].mxu0
      %v458 = vadd.f32 0.0, %v457
      %v459 = vpop.f32.mrb[0].mxu0
      %460 = vdwg.mxu0
      %vm461 = vcmask 31744
      %v462 = vsel %vm461, %v303, -inf
      %463 = vmax.xlane.f32.xlu0 %v462
      %v464 = vpop.xlane.xlu0 %463
      %v465 = vsel %vm461, %v308, -inf
      %466 = vmax.xlane.f32.xlu0 %v465
      %v467 = vpop.xlane.xlu0 %466
      %v468 = vsel %vm461, %v313, -inf
      %469 = vmax.xlane.f32.xlu0 %v468
      %v470 = vpop.xlane.xlu0 %469
      %v471 = vsel %vm461, %v318, -inf
      %472 = vmax.xlane.f32.xlu0 %v471
      %v473 = vpop.xlane.xlu0 %472
      %v474 = vsel %vm461, %v323, -inf
      %475 = vmax.xlane.f32.xlu0 %v474
      %v476 = vpop.xlane.xlu0 %475
      %v477 = vsel %vm461, %v328, -inf
      %478 = vmax.xlane.f32.xlu0 %v477
      %v479 = vpop.xlane.xlu0 %478
      %v480 = vsel %vm461, %v333, -inf
      %481 = vmax.xlane.f32.xlu0 %v480
      %v482 = vpop.xlane.xlu0 %481
      %v483 = vsel %vm461, %v338, -inf
      %484 = vmax.xlane.f32.xlu0 %v483
      %v485 = vpop.xlane.xlu0 %484
      %v486 = vsel %vm461, %v343, -inf
      %487 = vmax.xlane.f32.xlu0 %v486
      %v488 = vpop.xlane.xlu0 %487
      %v489 = vsel %vm461, %v348, -inf
      %490 = vmax.xlane.f32.xlu0 %v489
      %v491 = vpop.xlane.xlu0 %490
      %v492 = vsel %vm461, %v353, -inf
      %493 = vmax.xlane.f32.xlu0 %v492
      %v494 = vpop.xlane.xlu0 %493
      %v495 = vsel %vm461, %v358, -inf
      %496 = vmax.xlane.f32.xlu0 %v495
      %v497 = vpop.xlane.xlu0 %496
      %v498 = vsel %vm461, %v363, -inf
      %499 = vmax.xlane.f32.xlu0 %v498
      %v500 = vpop.xlane.xlu0 %499
      %v501 = vsel %vm461, %v368, -inf
      %502 = vmax.xlane.f32.xlu0 %v501
      %v503 = vpop.xlane.xlu0 %502
      %v504 = vsel %vm461, %v373, -inf
      %505 = vmax.xlane.f32.xlu0 %v504
      %v506 = vpop.xlane.xlu0 %505
      %v507 = vsel %vm461, %v378, -inf
      %508 = vmax.xlane.f32.xlu0 %v507
      %v509 = vpop.xlane.xlu0 %508
      %v510 = vsel %vm461, %v383, -inf
      %511 = vmax.xlane.f32.xlu0 %v510
      %v512 = vpop.xlane.xlu0 %511
      %v513 = vsel %vm461, %v388, -inf
      %514 = vmax.xlane.f32.xlu0 %v513
      %v515 = vpop.xlane.xlu0 %514
      %v516 = vsel %vm461, %v393, -inf
      %517 = vmax.xlane.f32.xlu0 %v516
      %v518 = vpop.xlane.xlu0 %517
      %v519 = vsel %vm461, %v398, -inf
      %520 = vmax.xlane.f32.xlu0 %v519
      %v521 = vpop.xlane.xlu0 %520
      %v522 = vsel %vm461, %v403, -inf
      %523 = vmax.xlane.f32.xlu0 %v522
      %v524 = vpop.xlane.xlu0 %523
      %v525 = vsel %vm461, %v408, -inf
      %526 = vmax.xlane.f32.xlu0 %v525
      %v527 = vpop.xlane.xlu0 %526
      %v528 = vsel %vm461, %v413, -inf
      %529 = vmax.xlane.f32.xlu0 %v528
      %v530 = vpop.xlane.xlu0 %529
      %v531 = vsel %vm461, %v418, -inf
      %532 = vmax.xlane.f32.xlu0 %v531
      %v533 = vpop.xlane.xlu0 %532
      %v534 = vsel %vm461, %v423, -inf
      %535 = vmax.xlane.f32.xlu0 %v534
      %v536 = vpop.xlane.xlu0 %535
      %v537 = vsel %vm461, %v428, -inf
      %538 = vmax.xlane.f32.xlu0 %v537
      %v539 = vpop.xlane.xlu0 %538
      %v540 = vsel %vm461, %v433, -inf
      %541 = vmax.xlane.f32.xlu0 %v540
      %v542 = vpop.xlane.xlu0 %541
      %v543 = vsel %vm461, %v438, -inf
      %544 = vmax.xlane.f32.xlu0 %v543
      %v545 = vpop.xlane.xlu0 %544
      %v546 = vsel %vm461, %v443, -inf
      %547 = vmax.xlane.f32.xlu0 %v546
      %v548 = vpop.xlane.xlu0 %547
      %v549 = vsel %vm461, %v448, -inf
      %550 = vmax.xlane.f32.xlu0 %v549
      %v551 = vpop.xlane.xlu0 %550
      %v552 = vsel %vm461, %v453, -inf
      %553 = vmax.xlane.f32.xlu0 %v552
      %v554 = vpop.xlane.xlu0 %553
      %v555 = vsel %vm461, %v458, -inf
      %556 = vmax.xlane.f32.xlu0 %v555
      %v557 = vpop.xlane.xlu0 %556
      %v558 = vsub.f32 %v303, %v464
      %v559 = vsub.f32 %v308, %v467
      %v560 = vsub.f32 %v313, %v470
      %v561 = vsub.f32 %v318, %v473
      %v562 = vsub.f32 %v323, %v476
      %v563 = vsub.f32 %v328, %v479
      %v564 = vsub.f32 %v333, %v482
      %v565 = vsub.f32 %v338, %v485
      %v566 = vsub.f32 %v343, %v488
      %v567 = vsub.f32 %v348, %v491
      %v568 = vsub.f32 %v353, %v494
      %v569 = vsub.f32 %v358, %v497
      %v570 = vsub.f32 %v363, %v500
      %v571 = vsub.f32 %v368, %v503
      %v572 = vsub.f32 %v373, %v506
      %v573 = vsub.f32 %v378, %v509
      %v574 = vsub.f32 %v383, %v512
      %v575 = vsub.f32 %v388, %v515
      %v576 = vsub.f32 %v393, %v518
      %v577 = vsub.f32 %v398, %v521
      %v578 = vsub.f32 %v403, %v524
      %v579 = vsub.f32 %v408, %v527
      %v580 = vsub.f32 %v413, %v530
      %v581 = vsub.f32 %v418, %v533
      %v582 = vsub.f32 %v423, %v536
      %v583 = vsub.f32 %v428, %v539
      %v584 = vsub.f32 %v433, %v542
      %v585 = vsub.f32 %v438, %v545
      %v586 = vsub.f32 %v443, %v548
      %v587 = vsub.f32 %v448, %v551
      %v588 = vsub.f32 %v453, %v554
      %v589 = vsub.f32 %v458, %v557
      %v590 = vmul.f32 %v558, 1.442695
      %v591 = vpow.pop %v590
      %v592 = vmul.f32 %v559, 1.442695
      %v593 = vpow.pop %v592
      %v594 = vmul.f32 %v560, 1.442695
      %v595 = vpow.pop %v594
      %v596 = vmul.f32 %v561, 1.442695
      %v597 = vpow.pop %v596
      %v598 = vmul.f32 %v562, 1.442695
      %v599 = vpow.pop %v598
      %v600 = vmul.f32 %v563, 1.442695
      %v601 = vpow.pop %v600
      %v602 = vmul.f32 %v564, 1.442695
      %v603 = vpow.pop %v602
      %v604 = vmul.f32 %v565, 1.442695
      %v605 = vpow.pop %v604
      %v606 = vmul.f32 %v566, 1.442695
      %v607 = vpow.pop %v606
      %v608 = vmul.f32 %v567, 1.442695
      %v609 = vpow.pop %v608
      %v610 = vmul.f32 %v568, 1.442695
      %v611 = vpow.pop %v610
      %v612 = vmul.f32 %v569, 1.442695
      %v613 = vpow.pop %v612
      %v614 = vmul.f32 %v570, 1.442695
      %v615 = vpow.pop %v614
      %v616 = vmul.f32 %v571, 1.442695
      %v617 = vpow.pop %v616
      %v618 = vmul.f32 %v572, 1.442695
      %v619 = vpow.pop %v618
      %v620 = vmul.f32 %v573, 1.442695
      %v621 = vpow.pop %v620
      %v622 = vmul.f32 %v574, 1.442695
      %v623 = vpow.pop %v622
      %v624 = vmul.f32 %v575, 1.442695
      %v625 = vpow.pop %v624
      %v626 = vmul.f32 %v576, 1.442695
      %v627 = vpow.pop %v626
      %v628 = vmul.f32 %v577, 1.442695
      %v629 = vpow.pop %v628
      %v630 = vmul.f32 %v578, 1.442695
      %v631 = vpow.pop %v630
      %v632 = vmul.f32 %v579, 1.442695
      %v633 = vpow.pop %v632
      %v634 = vmul.f32 %v580, 1.442695
      %v635 = vpow.pop %v634
      %v636 = vmul.f32 %v581, 1.442695
      %v637 = vpow.pop %v636
      %v638 = vmul.f32 %v582, 1.442695
      %v639 = vpow.pop %v638
      %v640 = vmul.f32 %v583, 1.442695
      %v641 = vpow.pop %v640
      %v642 = vmul.f32 %v584, 1.442695
      %v643 = vpow.pop %v642
      %v644 = vmul.f32 %v585, 1.442695
      %v645 = vpow.pop %v644
      %v646 = vmul.f32 %v586, 1.442695
      %v647 = vpow.pop %v646
      %v648 = vmul.f32 %v587, 1.442695
      %v649 = vpow.pop %v648
      %v650 = vmul.f32 %v588, 1.442695
      %v651 = vpow.pop %v650
      %v652 = vmul.f32 %v589, 1.442695
      %v653 = vpow.pop %v652
      %v654 = vsel %vm461, %v591, 0.0
      %655 = vadd.xlane.f32.xlu0 %v654
      %v656 = vpop.xlane.xlu0 %655
      %v657 = vsel %vm461, %v593, 0.0
      %658 = vadd.xlane.f32.xlu0 %v657
      %v659 = vpop.xlane.xlu0 %658
      %v660 = vsel %vm461, %v595, 0.0
      %661 = vadd.xlane.f32.xlu0 %v660
      %v662 = vpop.xlane.xlu0 %661
      %v663 = vsel %vm461, %v597, 0.0
      %664 = vadd.xlane.f32.xlu0 %v663
      %v665 = vpop.xlane.xlu0 %664
      %v666 = vsel %vm461, %v599, 0.0
      %667 = vadd.xlane.f32.xlu0 %v666
      %v668 = vpop.xlane.xlu0 %667
      %v669 = vsel %vm461, %v601, 0.0
      %670 = vadd.xlane.f32.xlu0 %v669
      %v671 = vpop.xlane.xlu0 %670
      %v672 = vsel %vm461, %v603, 0.0
      %673 = vadd.xlane.f32.xlu0 %v672
      %v674 = vpop.xlane.xlu0 %673
      %v675 = vsel %vm461, %v605, 0.0
      %676 = vadd.xlane.f32.xlu0 %v675
      %v677 = vpop.xlane.xlu0 %676
      %v678 = vsel %vm461, %v607, 0.0
      %679 = vadd.xlane.f32.xlu0 %v678
      %v680 = vpop.xlane.xlu0 %679
      %v681 = vsel %vm461, %v609, 0.0
      %682 = vadd.xlane.f32.xlu0 %v681
      %v683 = vpop.xlane.xlu0 %682
      %v684 = vsel %vm461, %v611, 0.0
      %685 = vadd.xlane.f32.xlu0 %v684
      %v686 = vpop.xlane.xlu0 %685
      %v687 = vsel %vm461, %v613, 0.0
      %688 = vadd.xlane.f32.xlu0 %v687
      %v689 = vpop.xlane.xlu0 %688
      %v690 = vsel %vm461, %v615, 0.0
      %691 = vadd.xlane.f32.xlu0 %v690
      %v692 = vpop.xlane.xlu0 %691
      %v693 = vsel %vm461, %v617, 0.0
      %694 = vadd.xlane.f32.xlu0 %v693
      %v695 = vpop.xlane.xlu0 %694
      %v696 = vsel %vm461, %v619, 0.0
      %697 = vadd.xlane.f32.xlu0 %v696
      %v698 = vpop.xlane.xlu0 %697
      %v699 = vsel %vm461, %v621, 0.0
      %700 = vadd.xlane.f32.xlu0 %v699
      %v701 = vpop.xlane.xlu0 %700
      %v702 = vsel %vm461, %v623, 0.0
      %703 = vadd.xlane.f32.xlu0 %v702
      %v704 = vpop.xlane.xlu0 %703
      %v705 = vsel %vm461, %v625, 0.0
      %706 = vadd.xlane.f32.xlu0 %v705
      %v707 = vpop.xlane.xlu0 %706
      %v708 = vsel %vm461, %v627, 0.0
      %709 = vadd.xlane.f32.xlu0 %v708
      %v710 = vpop.xlane.xlu0 %709
      %v711 = vsel %vm461, %v629, 0.0
      %712 = vadd.xlane.f32.xlu0 %v711
      %v713 = vpop.xlane.xlu0 %712
      %v714 = vsel %vm461, %v631, 0.0
      %715 = vadd.xlane.f32.xlu0 %v714
      %v716 = vpop.xlane.xlu0 %715
      %v717 = vsel %vm461, %v633, 0.0
      %718 = vadd.xlane.f32.xlu0 %v717
      %v719 = vpop.xlane.xlu0 %718
      %v720 = vsel %vm461, %v635, 0.0
      %721 = vadd.xlane.f32.xlu0 %v720
      %v722 = vpop.xlane.xlu0 %721
      %v723 = vsel %vm461, %v637, 0.0
      %724 = vadd.xlane.f32.xlu0 %v723
      %v725 = vpop.xlane.xlu0 %724
      %v726 = vsel %vm461, %v639, 0.0
      %727 = vadd.xlane.f32.xlu0 %v726
      %v728 = vpop.xlane.xlu0 %727
      %v729 = vsel %vm461, %v641, 0.0
      %730 = vadd.xlane.f32.xlu0 %v729
      %v731 = vpop.xlane.xlu0 %730
      %v732 = vsel %vm461, %v643, 0.0
      %733 = vadd.xlane.f32.xlu0 %v732
      %v734 = vpop.xlane.xlu0 %733
      %v735 = vsel %vm461, %v645, 0.0
      %736 = vadd.xlane.f32.xlu0 %v735
      %v737 = vpop.xlane.xlu0 %736
      %v738 = vsel %vm461, %v647, 0.0
      %739 = vadd.xlane.f32.xlu0 %v738
      %v740 = vpop.xlane.xlu0 %739
      %v741 = vsel %vm461, %v649, 0.0
      %742 = vadd.xlane.f32.xlu0 %v741
      %v743 = vpop.xlane.xlu0 %742
      %v744 = vsel %vm461, %v651, 0.0
      %745 = vadd.xlane.f32.xlu0 %v744
      %v746 = vpop.xlane.xlu0 %745
      %v747 = vsel %vm461, %v653, 0.0
      %748 = vadd.xlane.f32.xlu0 %v747
      %v749 = vpop.xlane.xlu0 %748
      %v750 = vrcp.pop %v656
      %v751 = vmul.f32 %v591, %v750
      %v752 = vrcp.pop %v659
      %v753 = vmul.f32 %v593, %v752
      %v754 = vrcp.pop %v662
      %v755 = vmul.f32 %v595, %v754
      %v756 = vrcp.pop %v665
      %v757 = vmul.f32 %v597, %v756
      %v758 = vrcp.pop %v668
      %v759 = vmul.f32 %v599, %v758
      %v760 = vrcp.pop %v671
      %v761 = vmul.f32 %v601, %v760
      %v762 = vrcp.pop %v674
      %v763 = vmul.f32 %v603, %v762
      %v764 = vrcp.pop %v677
      %v765 = vmul.f32 %v605, %v764
      %v766 = vrcp.pop %v680
      %v767 = vmul.f32 %v607, %v766
      %v768 = vrcp.pop %v683
      %v769 = vmul.f32 %v609, %v768
      %v770 = vrcp.pop %v686
      %v771 = vmul.f32 %v611, %v770
      %v772 = vrcp.pop %v689
      %v773 = vmul.f32 %v613, %v772
      %v774 = vrcp.pop %v692
      %v775 = vmul.f32 %v615, %v774
      %v776 = vrcp.pop %v695
      %v777 = vmul.f32 %v617, %v776
      %v778 = vrcp.pop %v698
      %v779 = vmul.f32 %v619, %v778
      %v780 = vrcp.pop %v701
      %v781 = vmul.f32 %v621, %v780
      %v782 = vrcp.pop %v704
      %v783 = vmul.f32 %v623, %v782
      %v784 = vrcp.pop %v707
      %v785 = vmul.f32 %v625, %v784
      %v786 = vrcp.pop %v710
      %v787 = vmul.f32 %v627, %v786
      %v788 = vrcp.pop %v713
      %v789 = vmul.f32 %v629, %v788
      %v790 = vrcp.pop %v716
      %v791 = vmul.f32 %v631, %v790
      %v792 = vrcp.pop %v719
      %v793 = vmul.f32 %v633, %v792
      %v794 = vrcp.pop %v722
      %v795 = vmul.f32 %v635, %v794
      %v796 = vrcp.pop %v725
      %v797 = vmul.f32 %v637, %v796
      %v798 = vrcp.pop %v728
      %v799 = vmul.f32 %v639, %v798
      %v800 = vrcp.pop %v731
      %v801 = vmul.f32 %v641, %v800
      %v802 = vrcp.pop %v734
      %v803 = vmul.f32 %v643, %v802
      %v804 = vrcp.pop %v737
      %v805 = vmul.f32 %v645, %v804
      %v806 = vrcp.pop %v740
      %v807 = vmul.f32 %v647, %v806
      %v808 = vrcp.pop %v743
      %v809 = vmul.f32 %v649, %v808
      %v810 = vrcp.pop %v746
      %v811 = vmul.f32 %v651, %v810
      %v812 = vrcp.pop %v749
      %v813 = vmul.f32 %v653, %v812
      %814 = vst.msk [vmem:[%s180] sm:$0xff] %vm461, %v751
      %815 = vst.msk [vmem:[%s180 + $0x8] sm:$0xff] %vm461, %v753
      %816 = vst.msk [vmem:[%s180 + $0x10] sm:$0xff] %vm461, %v755
      %817 = vst.msk [vmem:[%s180 + $0x18] sm:$0xff] %vm461, %v757
      %818 = vst.msk [vmem:[%s180 + $0x20] sm:$0xff] %vm461, %v759
      %819 = vst.msk [vmem:[%s180 + $0x28] sm:$0xff] %vm461, %v761
      %820 = vst.msk [vmem:[%s180 + $0x30] sm:$0xff] %vm461, %v763
      %821 = vst.msk [vmem:[%s180 + $0x38] sm:$0xff] %vm461, %v765
      %822 = vst.msk [vmem:[%s180 + $0x40] sm:$0xff] %vm461, %v767
      %823 = vst.msk [vmem:[%s180 + $0x48] sm:$0xff] %vm461, %v769
      %824 = vst.msk [vmem:[%s180 + $0x50] sm:$0xff] %vm461, %v771
      %825 = vst.msk [vmem:[%s180 + $0x58] sm:$0xff] %vm461, %v773
      %826 = vst.msk [vmem:[%s180 + $0x60] sm:$0xff] %vm461, %v775
      %827 = vst.msk [vmem:[%s180 + $0x68] sm:$0xff] %vm461, %v777
      %828 = vst.msk [vmem:[%s180 + $0x70] sm:$0xff] %vm461, %v779
      %829 = vst.msk [vmem:[%s180 + $0x78] sm:$0xff] %vm461, %v781
      %830 = vst.msk [vmem:[%s180 + $0x80] sm:$0xff] %vm461, %v783
      %831 = vst.msk [vmem:[%s180 + $0x88] sm:$0xff] %vm461, %v785
      %832 = vst.msk [vmem:[%s180 + $0x90] sm:$0xff] %vm461, %v787
      %833 = vst.msk [vmem:[%s180 + $0x98] sm:$0xff] %vm461, %v789
      %834 = vst.msk [vmem:[%s180 + $0xa0] sm:$0xff] %vm461, %v791
      %835 = vst.msk [vmem:[%s180 + $0xa8] sm:$0xff] %vm461, %v793
      %836 = vst.msk [vmem:[%s180 + $0xb0] sm:$0xff] %vm461, %v795
      %837 = vst.msk [vmem:[%s180 + $0xb8] sm:$0xff] %vm461, %v797
      %838 = vst.msk [vmem:[%s180 + $0xc0] sm:$0xff] %vm461, %v799
      %839 = vst.msk [vmem:[%s180 + $0xc8] sm:$0xff] %vm461, %v801
      %840 = vst.msk [vmem:[%s180 + $0xd0] sm:$0xff] %vm461, %v803
      %841 = vst.msk [vmem:[%s180 + $0xd8] sm:$0xff] %vm461, %v805
      %842 = vst.msk [vmem:[%s180 + $0xe0] sm:$0xff] %vm461, %v807
      %843 = vst.msk [vmem:[%s180 + $0xe8] sm:$0xff] %vm461, %v809
      %844 = vst.msk [vmem:[%s180 + $0xf0] sm:$0xff] %vm461, %v811
      %845 = vst.msk [vmem:[%s180 + $0xf8] sm:$0xff] %vm461, %v813
      %v846 = vlog2.pop %v656
      %v847 = vmul.f32 %v846, 0.6931472
      %v848 = vlog2.pop %v659
      %v849 = vmul.f32 %v848, 0.6931472
      %v850 = vlog2.pop %v662
      %v851 = vmul.f32 %v850, 0.6931472
      %v852 = vlog2.pop %v665
      %v853 = vmul.f32 %v852, 0.6931472
      %v854 = vlog2.pop %v668
      %v855 = vmul.f32 %v854, 0.6931472
      %v856 = vlog2.pop %v671
      %v857 = vmul.f32 %v856, 0.6931472
      %v858 = vlog2.pop %v674
      %v859 = vmul.f32 %v858, 0.6931472
      %v860 = vlog2.pop %v677
      %v861 = vmul.f32 %v860, 0.6931472
      %v862 = vlog2.pop %v680
      %v863 = vmul.f32 %v862, 0.6931472
      %v864 = vlog2.pop %v683
      %v865 = vmul.f32 %v864, 0.6931472
      %v866 = vlog2.pop %v686
      %v867 = vmul.f32 %v866, 0.6931472
      %v868 = vlog2.pop %v689
      %v869 = vmul.f32 %v868, 0.6931472
      %v870 = vlog2.pop %v692
      %v871 = vmul.f32 %v870, 0.6931472
      %v872 = vlog2.pop %v695
      %v873 = vmul.f32 %v872, 0.6931472
      %v874 = vlog2.pop %v698
      %v875 = vmul.f32 %v874, 0.6931472
      %v876 = vlog2.pop %v701
      %v877 = vmul.f32 %v876, 0.6931472
      %v878 = vlog2.pop %v704
      %v879 = vmul.f32 %v878, 0.6931472
      %v880 = vlog2.pop %v707
      %v881 = vmul.f32 %v880, 0.6931472
      %v882 = vlog2.pop %v710
      %v883 = vmul.f32 %v882, 0.6931472
      %v884 = vlog2.pop %v713
      %v885 = vmul.f32 %v884, 0.6931472
      %v886 = vlog2.pop %v716
      %v887 = vmul.f32 %v886, 0.6931472
      %v888 = vlog2.pop %v719
      %v889 = vmul.f32 %v888, 0.6931472
      %v890 = vlog2.pop %v722
      %v891 = vmul.f32 %v890, 0.6931472
      %v892 = vlog2.pop %v725
      %v893 = vmul.f32 %v892, 0.6931472
      %v894 = vlog2.pop %v728
      %v895 = vmul.f32 %v894, 0.6931472
      %v896 = vlog2.pop %v731
      %v897 = vmul.f32 %v896, 0.6931472
      %v898 = vlog2.pop %v734
      %v899 = vmul.f32 %v898, 0.6931472
      %v900 = vlog2.pop %v737
      %v901 = vmul.f32 %v900, 0.6931472
      %v902 = vlog2.pop %v740
      %v903 = vmul.f32 %v902, 0.6931472
      %v904 = vlog2.pop %v743
      %v905 = vmul.f32 %v904, 0.6931472
      %v906 = vlog2.pop %v746
      %v907 = vmul.f32 %v906, 0.6931472
      %v908 = vlog2.pop %v749
      %v909 = vmul.f32 %v908, 0.6931472
      %v910 = vadd.f32 %v464, %v847
      %v911 = vadd.f32 %v467, %v849
      %v912 = vadd.f32 %v470, %v851
      %v913 = vadd.f32 %v473, %v853
      %v914 = vadd.f32 %v476, %v855
      %v915 = vadd.f32 %v479, %v857
      %v916 = vadd.f32 %v482, %v859
      %v917 = vadd.f32 %v485, %v861
      %v918 = vadd.f32 %v488, %v863
      %v919 = vadd.f32 %v491, %v865
      %v920 = vadd.f32 %v494, %v867
      %v921 = vadd.f32 %v497, %v869
      %v922 = vadd.f32 %v500, %v871
      %v923 = vadd.f32 %v503, %v873
      %v924 = vadd.f32 %v506, %v875
      %v925 = vadd.f32 %v509, %v877
      %v926 = vadd.f32 %v512, %v879
      %v927 = vadd.f32 %v515, %v881
      %v928 = vadd.f32 %v518, %v883
      %v929 = vadd.f32 %v521, %v885
      %v930 = vadd.f32 %v524, %v887
      %v931 = vadd.f32 %v527, %v889
      %v932 = vadd.f32 %v530, %v891
      %v933 = vadd.f32 %v533, %v893
      %v934 = vadd.f32 %v536, %v895
      %v935 = vadd.f32 %v539, %v897
      %v936 = vadd.f32 %v542, %v899
      %v937 = vadd.f32 %v545, %v901
      %v938 = vadd.f32 %v548, %v903
      %v939 = vadd.f32 %v551, %v905
      %v940 = vadd.f32 %v554, %v907
      %v941 = vadd.f32 %v557, %v909
      %v942 = vmul.f32 %v910, %v910
      %v943 = vmul.f32 %v911, %v911
      %v944 = vmul.f32 %v912, %v912
      %v945 = vmul.f32 %v913, %v913
      %v946 = vmul.f32 %v914, %v914
      %v947 = vmul.f32 %v915, %v915
      %v948 = vmul.f32 %v916, %v916
      %v949 = vmul.f32 %v917, %v917
      %v950 = vmul.f32 %v918, %v918
      %v951 = vmul.f32 %v919, %v919
      %v952 = vmul.f32 %v920, %v920
      %v953 = vmul.f32 %v921, %v921
      %v954 = vmul.f32 %v922, %v922
      %v955 = vmul.f32 %v923, %v923
      %v956 = vmul.f32 %v924, %v924
      %v957 = vmul.f32 %v925, %v925
      %v958 = vmul.f32 %v926, %v926
      %v959 = vmul.f32 %v927, %v927
      %v960 = vmul.f32 %v928, %v928
      %v961 = vmul.f32 %v929, %v929
      %v962 = vmul.f32 %v930, %v930
      %v963 = vmul.f32 %v931, %v931
      %v964 = vmul.f32 %v932, %v932
      %v965 = vmul.f32 %v933, %v933
      %v966 = vmul.f32 %v934, %v934
      %v967 = vmul.f32 %v935, %v935
      %v968 = vmul.f32 %v936, %v936
      %v969 = vmul.f32 %v937, %v937
      %v970 = vmul.f32 %v938, %v938
      %v971 = vmul.f32 %v939, %v939
      %v972 = vmul.f32 %v940, %v940
      %v973 = vmul.f32 %v941, %v941
      %vm974 = vcmask 7168
      %975 = vst.msk [vmem:[%s186] sm:$0xff] %vm974, %v942
      %976 = vst.msk [vmem:[%s186 + $0x8] sm:$0xff] %vm974, %v943
      %977 = vst.msk [vmem:[%s186 + $0x10] sm:$0xff] %vm974, %v944
      %978 = vst.msk [vmem:[%s186 + $0x18] sm:$0xff] %vm974, %v945
      %979 = vst.msk [vmem:[%s186 + $0x20] sm:$0xff] %vm974, %v946
      %980 = vst.msk [vmem:[%s186 + $0x28] sm:$0xff] %vm974, %v947
      %981 = vst.msk [vmem:[%s186 + $0x30] sm:$0xff] %vm974, %v948
      %982 = vst.msk [vmem:[%s186 + $0x38] sm:$0xff] %vm974, %v949
      %983 = vst.msk [vmem:[%s186 + $0x40] sm:$0xff] %vm974, %v950
      %984 = vst.msk [vmem:[%s186 + $0x48] sm:$0xff] %vm974, %v951
      %985 = vst.msk [vmem:[%s186 + $0x50] sm:$0xff] %vm974, %v952
      %986 = vst.msk [vmem:[%s186 + $0x58] sm:$0xff] %vm974, %v953
      %987 = vst.msk [vmem:[%s186 + $0x60] sm:$0xff] %vm974, %v954
      %988 = vst.msk [vmem:[%s186 + $0x68] sm:$0xff] %vm974, %v955
      %989 = vst.msk [vmem:[%s186 + $0x70] sm:$0xff] %vm974, %v956
      %990 = vst.msk [vmem:[%s186 + $0x78] sm:$0xff] %vm974, %v957
      %991 = vst.msk [vmem:[%s186 + $0x80] sm:$0xff] %vm974, %v958
      %992 = vst.msk [vmem:[%s186 + $0x88] sm:$0xff] %vm974, %v959
      %993 = vst.msk [vmem:[%s186 + $0x90] sm:$0xff] %vm974, %v960
      %994 = vst.msk [vmem:[%s186 + $0x98] sm:$0xff] %vm974, %v961
      %995 = vst.msk [vmem:[%s186 + $0xa0] sm:$0xff] %vm974, %v962
      %996 = vst.msk [vmem:[%s186 + $0xa8] sm:$0xff] %vm974, %v963
      %997 = vst.msk [vmem:[%s186 + $0xb0] sm:$0xff] %vm974, %v964
      %998 = vst.msk [vmem:[%s186 + $0xb8] sm:$0xff] %vm974, %v965
      %999 = vst.msk [vmem:[%s186 + $0xc0] sm:$0xff] %vm974, %v966
      %1000 = vst.msk [vmem:[%s186 + $0xc8] sm:$0xff] %vm974, %v967
      %1001 = vst.msk [vmem:[%s186 + $0xd0] sm:$0xff] %vm974, %v968
      %1002 = vst.msk [vmem:[%s186 + $0xd8] sm:$0xff] %vm974, %v969
      %1003 = vst.msk [vmem:[%s186 + $0xe0] sm:$0xff] %vm974, %v970
      %1004 = vst.msk [vmem:[%s186 + $0xe8] sm:$0xff] %vm974, %v971
      %1005 = vst.msk [vmem:[%s186 + $0xf0] sm:$0xff] %vm974, %v972
      %1006 = vst.msk [vmem:[%s186 + $0xf8] sm:$0xff] %vm974, %v973
      %s1007 = smul.u32 32, %s15
      %p1008 = scmp.lt.s32.totalorder %s1007, 63
      %s1009 = scalar_select %p1008, %s1007, 63
      %s1010 = smul.addr %s1009, 8
      %s1011 = scalar_lea.vmem %s2, %s1010
      %s1012 = smul.u32 32, %s15
      %p1013 = scmp.lt.s32.totalorder %s1012, 63
      %s1014 = scalar_select %p1013, %s1012, 63
      %s1015 = smul.addr %s1014, 8
      %s1016 = scalar_lea.vmem %s3, %s1015
      // Predicated region
      $region29: #{_lambda_.2} parent=27 // pred_check
        %p1017 = pneg %p80
      $region30: #{_lambda_.2} parent=27 // pred_check_branch
        %1019 = sbr.rel (%p1017) target = $region32
      $region31: #{_lambda_.2} parent=27 // pred_region
        %s1020 = smul.u32 32, %s15
      $region32: #{_lambda_.2} parent=27 // pred_fallthru
        _
      // Predicated region
      $region33: #{_lambda_.2} parent=27 // pred_check
        %p1021 = pneg %p106
      $region34: #{_lambda_.2} parent=27 // pred_check_branch
        %1023 = sbr.rel (%p1021) target = $region36
      $region35: #{_lambda_.2} parent=27 // pred_region
        %s1024 = smul.u32 32, %s15
      $region36: #{_lambda_.2} parent=27 // pred_fallthru
        _
    $region28: #{_lambda_.2} parent=5 // pred_fallthru
      _
    %p1025 = scmp.le.s32.totalorder 2, %s10
    // Predicated region
    $region37: #{_lambda_.2} parent=5 // pred_check
      %p1026 = pneg %p1025
    $region38: #{_lambda_.2} parent=5 // pred_check_branch
      %1028 = sbr.rel (%p1026) target = $region40
    $region39: #{_lambda_.2} parent=5 // pred_region
      %s1029 = ssub.s32 %s10, 2
      // Predicated region
      $region41: #{_lambda_.2} parent=39 // pred_check
        %p1030 = pneg %p86
      $region42: #{_lambda_.2} parent=39 // pred_check_branch
        %1032 = sbr.rel (%p1030) target = $region44
      $region43: #{_lambda_.2} parent=39 // pred_region
        %s1033 = smul.u32 32, %s16
        %p1034 = scmp.lt.s32.totalorder %s1033, 63
        %s1035 = scalar_select %p1034, %s1033, 63
        %s1036 = smul.addr %s1035, 8
        %s1037 = scalar_lea.vmem %s2, %s1036
      $region44: #{_lambda_.2} parent=39 // pred_fallthru
        _
      // Predicated region
      $region45: #{_lambda_.2} parent=39 // pred_check
        %p1038 = pneg %p112
      $region46: #{_lambda_.2} parent=39 // pred_check_branch
        %1040 = sbr.rel (%p1038) target = $region48
      $region47: #{_lambda_.2} parent=39 // pred_region
        %s1041 = smul.u32 32, %s16
        %p1042 = scmp.lt.s32.totalorder %s1041, 63
        %s1043 = scalar_select %p1042, %s1041, 63
        %s1044 = smul.addr %s1043, 8
        %s1045 = scalar_lea.vmem %s3, %s1044
      $region48: #{_lambda_.2} parent=39 // pred_fallthru
        _
    $region40: #{_lambda_.2} parent=5 // pred_fallthru
      _
  $region6: #{_lambda_.2} parent=0 // loop_footer
    %s14 = sadd.s32 1, %s10
  $region7: #{_lambda_.2} parent=0 // loop_footer_branch
    %9 = sbr.rel target = $region3
  $region8: #{_lambda_.2} parent=0 // loop_exit
    _

// kernel: _lambda_.3
$region0: #{_lambda_.3}
  #allocation0 [shape = 'u32[]', space=smem, size = 0x4, offset = 0x4, fixed_abs, tag = 'smem constant byte address 0x4 - core index']
  #allocation1 [shape = 'u32[144,128]{1,0:T(1,128)}', space=vmem, size = 0x12000, scoped, tag = 'internal scratch']
  #allocation2 [shape = 'f32[256,128]{1,0:T(8,128)}', space=vmem, size = 0x20000, scoped, tag = 'scratch operand']
  #allocation3 [shape = 'f32[256,1]{1,0:T(8,128)}', space=vmem, size = 0x20000, scoped, tag = 'scratch operand']
  %s0 = inlined_call_operand.vmem [shape: bf16[512,128], index: 0, kind: input, shape index: {}]
  %s1 = inlined_call_operand.vmem [shape: bf16[4,128,256], index: 1, kind: input, shape index: {}]
  %s2 = inlined_call_operand.vmem [shape: bf16[4,256,128], index: 2, kind: input, shape index: {}]
  %s3 = inlined_call_operand.vmem [shape: f32[512,4], index: 3, kind: input, shape index: {}]
  %s4 = inlined_call_operand.hbm [shape: f32[512,128], index: 4, kind: output, shape index: {}]
  %s5 = sld [smem:[#allocation0]]
  $region61: #{_lambda_.3} parent=0
    _
  %s7 = ssub.s32 1, %s5
  %s8 = scalar_select 0, %s7, %s5
  $region1: #{_lambda_.3} parent=0
    #allocation4 [shape = 'u8[262144]{0}', space=vmem, size = 0x40000, scoped, tag = 'output window, operand 0']
    #allocation5 [shape = 's32[2]{0}', space=sflag, size = 0x8, scoped, tag = 'scoped memory for _lambda_.3']
    %9 = vsyncpa [#allocation5], 0
    %s10 = scalar_lea.sflag [#allocation5], 1
    %11 = vsyncpa %s10, 0
    loop: start=0, step=1, limit=10
    $region2: #{_lambda_.3} parent=1 // loop_pre_header
      _
    $region3: #{_lambda_.3} parent=1 // loop_header
      %s13 = sphi 0, %s17
      %p14 = scmp.ge.s32.totalorder %s13, 10
      %s20 = sphi 0, %s39
      %s21 = sphi 0, %s35
      %s22 = sphi 0, %s31
      %s23 = sphi 0, %s20
      %s24 = sphi 0, %s21
      %s25 = sphi 0, %s22
      %s26 = sphi 0, %s23
      %s27 = sphi 0, %s24
      %s28 = sphi 0, %s25
      %s42 = sphi 0, %s44
      %s45 = sphi 0, %s42
      %s46 = sphi 0, %s45
      %s62 = sphi 0, %s46
      %s70 = sphi 0, %s72
      %s73 = sphi 0, %s70
      %s74 = sphi 0, %s73
      %s90 = sphi 0, %s74
      %s98 = sphi 0, %s100
      %s101 = sphi 0, %s98
      %s102 = sphi 0, %s101
      %s118 = sphi 0, %s102
      %s124 = sphi 0, %s126
      %s127 = sphi 0, %s124
      %s128 = sphi 0, %s127
      %s144 = sphi 0, %s128
      %s150 = sphi 0, %s152
      %s153 = sphi 0, %s150
      %s154 = sphi 0, %s153
      %s170 = sphi 0, %s154
    $region4: #{_lambda_.3} parent=1 // loop_header_branch
      %16 = sbr.rel (%p14) target = $region8
    $region5: #{_lambda_.3} parent=1 // loop_body
      %s18 = ssub.s32 %s13, 1
      %s19 = ssub.s32 %s13, 2
      %s29 = sadd.s32 1, %s22
      %p30 = scmp.ge.s32.totalorder %s29, 1
      %s31 = scalar_select %p30, 0, %s29
      %s32 = sadd.s32 1, %s21
      %s33 = scalar_select %p30, %s32, %s21
      %p34 = scmp.ge.s32.totalorder %s33, 4
      %s35 = scalar_select %p34, 0, %s33
      %s36 = sadd.s32 1, %s20
      %s37 = scalar_select %p34, %s36, %s20
      %p38 = scmp.ge.s32.totalorder %s37, 2
      %s39 = scalar_select %p38, 0, %s37
      %s40 = ssub.s32 %s20, %s39
      %p41 = scmp.eq.s32.totalorder %s40, 0
      %s43 = sadd.s32 %s42, 1
      %s44 = scalar_select %p41, %s42, %s43
      %p47 = pneg %p41
      %p48 = scmp.eq.s32.totalorder %s13, 7
      %p49 = por %p47, %p48
      %p50 = scmp.ne.s32.totalorder %s42, %s45
      %p51 = scmp.eq.s32.totalorder %s13, 0
      %p52 = por %p50, %p51
      %p53 = scmp.ne.s32.totalorder %s42, %s45
      %p54 = scmp.eq.s32.totalorder %s18, 7
      %p55 = por %p53, %p54
      %p56 = scmp.ne.s32.totalorder %s45, %s46
      %p57 = scmp.eq.s32.totalorder %s18, 0
      %p58 = por %p56, %p57
      %p59 = scmp.ne.s32.totalorder %s45, %s46
      %p60 = scmp.eq.s32.totalorder %s19, 7
      %p61 = por %p59, %p60
      %p63 = scmp.ne.s32.totalorder %s46, %s62
      %p64 = scmp.eq.s32.totalorder %s19, 0
      %p65 = por %p63, %p64
      %s66 = ssub.s32 %s21, %s35
      %s67 = ssub.s32 %s22, %s31
      %s68 = sor.u32 %s66, %s67
      %p69 = scmp.eq.s32.totalorder %s68, 0
      %s71 = sadd.s32 %s70, 1
      %s72 = scalar_select %p69, %s70, %s71
      %p75 = pneg %p69
      %p76 = scmp.eq.s32.totalorder %s13, 7
      %p77 = por %p75, %p76
      %p78 = scmp.ne.s32.totalorder %s70, %s73
      %p79 = scmp.eq.s32.totalorder %s13, 0
      %p80 = por %p78, %p79
      %p81 = scmp.ne.s32.totalorder %s70, %s73
      %p82 = scmp.eq.s32.totalorder %s18, 7
      %p83 = por %p81, %p82
      %p84 = scmp.ne.s32.totalorder %s73, %s74
      %p85 = scmp.eq.s32.totalorder %s18, 0
      %p86 = por %p84, %p85
      %p87 = scmp.ne.s32.totalorder %s73, %s74
      %p88 = scmp.eq.s32.totalorder %s19, 7
      %p89 = por %p87, %p88
      %p91 = scmp.ne.s32.totalorder %s74, %s90
      %p92 = scmp.eq.s32.totalorder %s19, 0
      %p93 = por %p91, %p92
      %s94 = ssub.s32 %s21, %s35
      %s95 = ssub.s32 %s22, %s31
      %s96 = sor.u32 %s94, %s95
      %p97 = scmp.eq.s32.totalorder %s96, 0
      %s99 = sadd.s32 %s98, 1
      %s100 = scalar_select %p97, %s98, %s99
      %p103 = pneg %p97
      %p104 = scmp.eq.s32.totalorder %s13, 7
      %p105 = por %p103, %p104
      %p106 = scmp.ne.s32.totalorder %s98, %s101
      %p107 = scmp.eq.s32.totalorder %s13, 0
      %p108 = por %p106, %p107
      %p109 = scmp.ne.s32.totalorder %s98, %s101
      %p110 = scmp.eq.s32.totalorder %s18, 7
      %p111 = por %p109, %p110
      %p112 = scmp.ne.s32.totalorder %s101, %s102
      %p113 = scmp.eq.s32.totalorder %s18, 0
      %p114 = por %p112, %p113
      %p115 = scmp.ne.s32.totalorder %s101, %s102
      %p116 = scmp.eq.s32.totalorder %s19, 7
      %p117 = por %p115, %p116
      %p119 = scmp.ne.s32.totalorder %s102, %s118
      %p120 = scmp.eq.s32.totalorder %s19, 0
      %p121 = por %p119, %p120
      %s122 = ssub.s32 %s20, %s39
      %p123 = scmp.eq.s32.totalorder %s122, 0
      %s125 = sadd.s32 %s124, 1
      %s126 = scalar_select %p123, %s124, %s125
      %p129 = pneg %p123
      %p130 = scmp.eq.s32.totalorder %s13, 7
      %p131 = por %p129, %p130
      %p132 = scmp.ne.s32.totalorder %s124, %s127
      %p133 = scmp.eq.s32.totalorder %s13, 0
      %p134 = por %p132, %p133
      %p135 = scmp.ne.s32.totalorder %s124, %s127
      %p136 = scmp.eq.s32.totalorder %s18, 7
      %p137 = por %p135, %p136
      %p138 = scmp.ne.s32.totalorder %s127, %s128
      %p139 = scmp.eq.s32.totalorder %s18, 0
      %p140 = por %p138, %p139
      %p141 = scmp.ne.s32.totalorder %s127, %s128
      %p142 = scmp.eq.s32.totalorder %s19, 7
      %p143 = por %p141, %p142
      %p145 = scmp.ne.s32.totalorder %s128, %s144
      %p146 = scmp.eq.s32.totalorder %s19, 0
      %p147 = por %p145, %p146
      %s148 = ssub.s32 %s20, %s39
      %p149 = scmp.eq.s32.totalorder %s148, 0
      %s151 = sadd.s32 %s150, 1
      %s152 = scalar_select %p149, %s150, %s151
      %p155 = pneg %p149
      %p156 = scmp.eq.s32.totalorder %s13, 7
      %p157 = por %p155, %p156
      %p158 = scmp.ne.s32.totalorder %s150, %s153
      %p159 = scmp.eq.s32.totalorder %s13, 0
      %p160 = por %p158, %p159
      %p161 = scmp.ne.s32.totalorder %s150, %s153
      %p162 = scmp.eq.s32.totalorder %s18, 7
      %p163 = por %p161, %p162
      %p164 = scmp.ne.s32.totalorder %s153, %s154
      %p165 = scmp.eq.s32.totalorder %s18, 0
      %p166 = por %p164, %p165
      %p167 = scmp.ne.s32.totalorder %s153, %s154
      %p168 = scmp.eq.s32.totalorder %s19, 7
      %p169 = por %p167, %p168
      %p171 = scmp.ne.s32.totalorder %s154, %s170
      %p172 = scmp.eq.s32.totalorder %s19, 0
      %p173 = por %p171, %p172
      %p174 = scmp.le.s32.totalorder 1, %s13
      %p175 = scmp.lt.s32.totalorder %s13, 9
      %p176 = pnand %p174, %p175
      %p177 = pneg %p176
      // Predicated region
      $region9: #{_lambda_.3} parent=5 // pred_check
        _
      $region10: #{_lambda_.3} parent=5 // pred_check_branch
        %179 = sbr.rel (%p176) target = $region12
      $region11: #{_lambda_.3} parent=5 // pred_region
        %s180 = ssub.s32 %s13, 1
      $region12: #{_lambda_.3} parent=5 // pred_fallthru
        _
      %p181 = scmp.lt.s32.totalorder %s13, 8
      // Predicated region
      $region13: #{_lambda_.3} parent=5 // pred_check
        %p182 = pneg %p181
      $region14: #{_lambda_.3} parent=5 // pred_check_branch
        %184 = sbr.rel (%p182) target = $region16
      $region15: #{_lambda_.3} parent=5 // pred_region
        // Predicated region
        $region17: #{_lambda_.3} parent=15 // pred_check
          %p185 = pneg %p52
        $region18: #{_lambda_.3} parent=15 // pred_check_branch
          %187 = sbr.rel (%p185) target = $region20
        $region19: #{_lambda_.3} parent=15 // pred_region
          %s188 = smul.u32 32, %s20
          %p189 = scmp.lt.s32.totalorder %s188, 63
          %s190 = scalar_select %p189, %s188, 63
          %s191 = smul.addr %s190, 4
          %s192 = scalar_lea.vmem %s0, %s191
          %s193 = smul.u32 32, %s20
        $region20: #{_lambda_.3} parent=15 // pred_fallthru
          _
        // Predicated region
        $region21: #{_lambda_.3} parent=15 // pred_check
          %p194 = pneg %p80
        $region22: #{_lambda_.3} parent=15 // pred_check_branch
          %196 = sbr.rel (%p194) target = $region24
        $region23: #{_lambda_.3} parent=15 // pred_region
          %s197 = smul.u32 2, %s22
          %p198 = scmp.lt.s32.totalorder %s21, 3
          %s199 = scalar_select %p198, %s21, 3
          %p200 = scmp.lt.s32.totalorder %s197, 1
          %s201 = scalar_select %p200, %s197, 1
          %s202 = smul.addr %s199, 32
          %s203 = sadd.s32 %s201, %s202
          %s204 = smul.addr %s203, 4
          %s205 = scalar_lea.vmem %s1, %s204
          %s206 = smul.u32 2, %s22
        $region24: #{_lambda_.3} parent=15 // pred_fallthru
          _
        // Predicated region
        $region25: #{_lambda_.3} parent=15 // pred_check
          %p207 = pneg %p108
        $region26: #{_lambda_.3} parent=15 // pred_check_branch
          %209 = sbr.rel (%p207) target = $region28
        $region27: #{_lambda_.3} parent=15 // pred_region
          %s210 = smul.u32 32, %s22
          %p211 = scmp.lt.s32.totalorder %s21, 3
          %s212 = scalar_select %p211, %s21, 3
          %p213 = scmp.lt.s32.totalorder %s210, 31
          %s214 = scalar_select %p213, %s210, 31
          %s215 = smul.addr %s212, 32
          %s216 = sadd.s32 %s214, %s215
          %s217 = smul.addr %s216, 4
          %s218 = scalar_lea.vmem %s2, %s217
          %s219 = smul.u32 32, %s22
        $region28: #{_lambda_.3} parent=15 // pred_fallthru
          _
        // Predicated region
        $region29: #{_lambda_.3} parent=15 // pred_check
          %p220 = pneg %p134
        $region30: #{_lambda_.3} parent=15 // pred_check_branch
          %222 = sbr.rel (%p220) target = $region32
        $region31: #{_lambda_.3} parent=15 // pred_region
          %s223 = smul.u32 32, %s20
          %p224 = scmp.lt.s32.totalorder %s223, 63
          %s225 = scalar_select %p224, %s223, 63
          %s226 = smul.addr %s225, 8
          %s227 = scalar_lea.vmem %s3, %s226
          %s228 = smul.u32 32, %s20
        $region32: #{_lambda_.3} parent=15 // pred_fallthru
          _
      $region16: #{_lambda_.3} parent=5 // pred_fallthru
        _
      %p229 = scmp.le.s32.totalorder 1, %s13
      %p230 = scmp.lt.s32.totalorder %s13, 9
      %p231 = pnand %p229, %p230
      %p232 = pneg %p231
      // Predicated region
      $region33: #{_lambda_.3} parent=5 // pred_check
        _
      $region34: #{_lambda_.3} parent=5 // pred_check_branch
        %234 = sbr.rel (%p231) target = $region36
      $region35: #{_lambda_.3} parent=5 // pred_region
        %s235 = ssub.s32 %s13, 1
        %s236 = smul.u32 32, %s23
        %p237 = scmp.lt.s32.totalorder %s236, 63
        %s238 = scalar_select %p237, %s236, 63
        %s239 = smul.addr %s238, 4
        %s240 = scalar_lea.vmem %s0, %s239
        %p241 = pneg %p58
        %p242 = pneg %p55
        %s243 = smul.u32 2, %s25
        %p244 = scmp.lt.s32.totalorder %s24, 3
        %s245 = scalar_select %p244, %s24, 3
        %p246 = scmp.lt.s32.totalorder %s243, 1
        %s247 = scalar_select %p246, %s243, 1
        %s248 = smul.addr %s245, 32
        %s249 = sadd.s32 %s247, %s248
        %s250 = smul.addr %s249, 4
        %s251 = scalar_lea.vmem %s1, %s250
        %p252 = pneg %p86
        %p253 = pneg %p83
        %s254 = smul.u32 32, %s25
        %p255 = scmp.lt.s32.totalorder %s24, 3
        %s256 = scalar_select %p255, %s24, 3
        %p257 = scmp.lt.s32.totalorder %s254, 31
        %s258 = scalar_select %p257, %s254, 31
        %s259 = smul.addr %s256, 32
        %s260 = sadd.s32 %s258, %s259
        %s261 = smul.addr %s260, 4
        %s262 = scalar_lea.vmem %s2, %s261
        %p263 = pneg %p114
        %p264 = pneg %p111
        %s265 = smul.u32 32, %s23
        %p266 = scmp.lt.s32.totalorder %s265, 63
        %s267 = scalar_select %p266, %s265, 63
        %s268 = smul.addr %s267, 8
        %s269 = scalar_lea.vmem %s3, %s268
        %p270 = pneg %p140
        %p271 = pneg %p137
        %p272 = pneg %p166
        %p273 = pneg %p163
        %s274 = sand.u32 %s153, 1
        %s275 = scalar_lea.sflag [#allocation5], %s274
        %s276 = sand.u32 %s153, 1
        %s277 = smul.addr %s276, 256
        %s278 = scalar_lea.vmem [#allocation4], %s277
        %s279 = smul.u32 32, %s23
        %p280 = scmp.lt.s32.totalorder %s279, 63
        %s281 = scalar_select %p280, %s279, 63
        %s282 = smul.addr %s281, 4
        %s283 = scalar_lea.vmem %s0, %s282
        %s284 = smul.u32 32, %s23
        %s285 = smul.u32 2, %s25
        %p286 = scmp.lt.s32.totalorder %s24, 3
        %s287 = scalar_select %p286, %s24, 3
        %p288 = scmp.lt.s32.totalorder %s285, 1
        %s289 = scalar_select %p288, %s285, 1
        %s290 = smul.addr %s287, 32
        %s291 = sadd.s32 %s289, %s290
        %s292 = smul.addr %s291, 4
        %s293 = scalar_lea.vmem %s1, %s292
        %s294 = smul.u32 2, %s25
        %s295 = smul.u32 32, %s25
        %p296 = scmp.lt.s32.totalorder %s24, 3
        %s297 = scalar_select %p296, %s24, 3
        %p298 = scmp.lt.s32.totalorder %s295, 31
        %s299 = scalar_select %p298, %s295, 31
        %s300 = smul.addr %s297, 32
        %s301 = sadd.s32 %s299, %s300
        %s302 = smul.addr %s301, 4
        %s303 = scalar_lea.vmem %s2, %s302
        %s304 = smul.u32 32, %s25
        %s305 = smul.u32 32, %s23
        %p306 = scmp.lt.s32.totalorder %s305, 63
        %s307 = scalar_select %p306, %s305, 63
        %s308 = smul.addr %s307, 8
        %s309 = scalar_lea.vmem %s3, %s308
        %s310 = smul.u32 32, %s23
        %s311 = smul.u32 32, %s23
        %p313 = scmp.eq.s32.totalorder %s24, 0
        %p314 = scmp.eq.s32.totalorder %s25, 0
        %p315 = pnand %p313, %p314
        %p316 = pneg %p315
        // Predicated region
        $region37: #{_lambda_.3} parent=35 // pred_check
          _
        $region38: #{_lambda_.3} parent=35 // pred_check_branch
          %318 = sbr.rel (%p315) target = $region40
        $region39: #{_lambda_.3} parent=35 // pred_region
          %319 = vst [vmem:[#allocation2] sm:$0xff] 0.0
          %320 = vst [vmem:[#allocation2 + $0x8] sm:$0xff] 0.0
          %321 = vst [vmem:[#allocation2 + $0x10] sm:$0xff] 0.0
          %322 = vst [vmem:[#allocation2 + $0x18] sm:$0xff] 0.0
          %323 = vst [vmem:[#allocation2 + $0x20] sm:$0xff] 0.0
          %324 = vst [vmem:[#allocation2 + $0x28] sm:$0xff] 0.0
          %325 = vst [vmem:[#allocation2 + $0x30] sm:$0xff] 0.0
          %326 = vst [vmem:[#allocation2 + $0x38] sm:$0xff] 0.0
          %327 = vst [vmem:[#allocation2 + $0x40] sm:$0xff] 0.0
          %328 = vst [vmem:[#allocation2 + $0x48] sm:$0xff] 0.0
          %329 = vst [vmem:[#allocation2 + $0x50] sm:$0xff] 0.0
          %330 = vst [vmem:[#allocation2 + $0x58] sm:$0xff] 0.0
          %331 = vst [vmem:[#allocation2 + $0x60] sm:$0xff] 0.0
          %332 = vst [vmem:[#allocation2 + $0x68] sm:$0xff] 0.0
          %333 = vst [vmem:[#allocation2 + $0x70] sm:$0xff] 0.0
          %334 = vst [vmem:[#allocation2 + $0x78] sm:$0xff] 0.0
          %335 = vst [vmem:[#allocation2 + $0x80] sm:$0xff] 0.0
          %336 = vst [vmem:[#allocation2 + $0x88] sm:$0xff] 0.0
          %337 = vst [vmem:[#allocation2 + $0x90] sm:$0xff] 0.0
          %338 = vst [vmem:[#allocation2 + $0x98] sm:$0xff] 0.0
          %339 = vst [vmem:[#allocation2 + $0xa0] sm:$0xff] 0.0
          %340 = vst [vmem:[#allocation2 + $0xa8] sm:$0xff] 0.0
          %341 = vst [vmem:[#allocation2 + $0xb0] sm:$0xff] 0.0
          %342 = vst [vmem:[#allocation2 + $0xb8] sm:$0xff] 0.0
          %343 = vst [vmem:[#allocation2 + $0xc0] sm:$0xff] 0.0
          %344 = vst [vmem:[#allocation2 + $0xc8] sm:$0xff] 0.0
          %345 = vst [vmem:[#allocation2 + $0xd0] sm:$0xff] 0.0
          %346 = vst [vmem:[#allocation2 + $0xd8] sm:$0xff] 0.0
          %347 = vst [vmem:[#allocation2 + $0xe0] sm:$0xff] 0.0
          %348 = vst [vmem:[#allocation2 + $0xe8] sm:$0xff] 0.0
          %349 = vst [vmem:[#allocation2 + $0xf0] sm:$0xff] 0.0
          %350 = vst [vmem:[#allocation2 + $0xf8] sm:$0xff] 0.0
        $region40: #{_lambda_.3} parent=35 // pred_fallthru
          _
        // Predicated region
        $region41: #{_lambda_.3} parent=35 // pred_check
          %p351 = pneg %p314
        $region42: #{_lambda_.3} parent=35 // pred_check_branch
          %353 = sbr.rel (%p351) target = $region44
        $region43: #{_lambda_.3} parent=35 // pred_region
          %v354 = vlaneseq
          %v355 = vand.u32 %v354, 127
          %v356 = vstv %s24
          %vm357 = vcmp.eq.s32.totalorder %v355, %v356
          %v358 = vld [vmem:[%s309] sm:$0xff]
          %v359 = vld [vmem:[%s309 + $0x8] sm:$0xff]
          %v360 = vld [vmem:[%s309 + $0x10] sm:$0xff]
          %v361 = vld [vmem:[%s309 + $0x18] sm:$0xff]
          %v362 = vld [vmem:[%s309 + $0x20] sm:$0xff]
          %v363 = vld [vmem:[%s309 + $0x28] sm:$0xff]
          %v364 = vld [vmem:[%s309 + $0x30] sm:$0xff]
          %v365 = vld [vmem:[%s309 + $0x38] sm:$0xff]
          %v366 = vld [vmem:[%s309 + $0x40] sm:$0xff]
          %v367 = vld [vmem:[%s309 + $0x48] sm:$0xff]
          %v368 = vld [vmem:[%s309 + $0x50] sm:$0xff]
          %v369 = vld [vmem:[%s309 + $0x58] sm:$0xff]
          %v370 = vld [vmem:[%s309 + $0x60] sm:$0xff]
          %v371 = vld [vmem:[%s309 + $0x68] sm:$0xff]
          %v372 = vld [vmem:[%s309 + $0x70] sm:$0xff]
          %v373 = vld [vmem:[%s309 + $0x78] sm:$0xff]
          %v374 = vld [vmem:[%s309 + $0x80] sm:$0xff]
          %v375 = vld [vmem:[%s309 + $0x88] sm:$0xff]
          %v376 = vld [vmem:[%s309 + $0x90] sm:$0xff]
          %v377 = vld [vmem:[%s309 + $0x98] sm:$0xff]
          %v378 = vld [vmem:[%s309 + $0xa0] sm:$0xff]
          %v379 = vld [vmem:[%s309 + $0xa8] sm:$0xff]
          %v380 = vld [vmem:[%s309 + $0xb0] sm:$0xff]
          %v381 = vld [vmem:[%s309 + $0xb8] sm:$0xff]
          %v382 = vld [vmem:[%s309 + $0xc0] sm:$0xff]
          %v383 = vld [vmem:[%s309 + $0xc8] sm:$0xff]
          %v384 = vld [vmem:[%s309 + $0xd0] sm:$0xff]
          %v385 = vld [vmem:[%s309 + $0xd8] sm:$0xff]
          %v386 = vld [vmem:[%s309 + $0xe0] sm:$0xff]
          %v387 = vld [vmem:[%s309 + $0xe8] sm:$0xff]
          %v388 = vld [vmem:[%s309 + $0xf0] sm:$0xff]
          %v389 = vld [vmem:[%s309 + $0xf8] sm:$0xff]
          %v390 = vsel %vm357, %v358, 0.0
          %v391 = vsel %vm357, %v359, 0.0
          %v392 = vsel %vm357, %v360, 0.0
          %v393 = vsel %vm357, %v361, 0.0
          %v394 = vsel %vm357, %v362, 0.0
          %v395 = vsel %vm357, %v363, 0.0
          %v396 = vsel %vm357, %v364, 0.0
          %v397 = vsel %vm357, %v365, 0.0
          %v398 = vsel %vm357, %v366, 0.0
          %v399 = vsel %vm357, %v367, 0.0
          %v400 = vsel %vm357, %v368, 0.0
          %v401 = vsel %vm357, %v369, 0.0
          %v402 = vsel %vm357, %v370, 0.0
          %v403 = vsel %vm357, %v371, 0.0
          %v404 = vsel %vm357, %v372, 0.0
          %v405 = vsel %vm357, %v373, 0.0
          %v406 = vsel %vm357, %v374, 0.0
          %v407 = vsel %vm357, %v375, 0.0
          %v408 = vsel %vm357, %v376, 0.0
          %v409 = vsel %vm357, %v377, 0.0
          %v410 = vsel %vm357, %v378, 0.0
          %v411 = vsel %vm357, %v379, 0.0
          %v412 = vsel %vm357, %v380, 0.0
          %v413 = vsel %vm357, %v381, 0.0
          %v414 = vsel %vm357, %v382, 0.0
          %v415 = vsel %vm357, %v383, 0.0
          %v416 = vsel %vm357, %v384, 0.0
          %v417 = vsel %vm357, %v385, 0.0
          %v418 = vsel %vm357, %v386, 0.0
          %v419 = vsel %vm357, %v387, 0.0
          %v420 = vsel %vm357, %v388, 0.0
          %v421 = vsel %vm357, %v389, 0.0
          %vm422 = vcmask 31744
          %v423 = vsel %vm422, %v390, 0.0
          %424 = vadd.xlane.f32.xlu0 %v423
          %v425 = vpop.xlane.xlu0 %424
          %v426 = vsel %vm422, %v391, 0.0
          %427 = vadd.xlane.f32.xlu0 %v426
          %v428 = vpop.xlane.xlu0 %427
          %v429 = vsel %vm422, %v392, 0.0
          %430 = vadd.xlane.f32.xlu0 %v429
          %v431 = vpop.xlane.xlu0 %430
          %v432 = vsel %vm422, %v393, 0.0
          %433 = vadd.xlane.f32.xlu0 %v432
          %v434 = vpop.xlane.xlu0 %433
          %v435 = vsel %vm422, %v394, 0.0
          %436 = vadd.xlane.f32.xlu0 %v435
          %v437 = vpop.xlane.xlu0 %436
          %v438 = vsel %vm422, %v395, 0.0
          %439 = vadd.xlane.f32.xlu0 %v438
          %v440 = vpop.xlane.xlu0 %439
          %v441 = vsel %vm422, %v396, 0.0
          %442 = vadd.xlane.f32.xlu0 %v441
          %v443 = vpop.xlane.xlu0 %442
          %v444 = vsel %vm422, %v397, 0.0
          %445 = vadd.xlane.f32.xlu0 %v444
          %v446 = vpop.xlane.xlu0 %445
          %v447 = vsel %vm422, %v398, 0.0
          %448 = vadd.xlane.f32.xlu0 %v447
          %v449 = vpop.xlane.xlu0 %448
          %v450 = vsel %vm422, %v399, 0.0
          %451 = vadd.xlane.f32.xlu0 %v450
          %v452 = vpop.xlane.xlu0 %451
          %v453 = vsel %vm422, %v400, 0.0
          %454 = vadd.xlane.f32.xlu0 %v453
          %v455 = vpop.xlane.xlu0 %454
          %v456 = vsel %vm422, %v401, 0.0
          %457 = vadd.xlane.f32.xlu0 %v456
          %v458 = vpop.xlane.xlu0 %457
          %v459 = vsel %vm422, %v402, 0.0
          %460 = vadd.xlane.f32.xlu0 %v459
          %v461 = vpop.xlane.xlu0 %460
          %v462 = vsel %vm422, %v403, 0.0
          %463 = vadd.xlane.f32.xlu0 %v462
          %v464 = vpop.xlane.xlu0 %463
          %v465 = vsel %vm422, %v404, 0.0
          %466 = vadd.xlane.f32.xlu0 %v465
          %v467 = vpop.xlane.xlu0 %466
          %v468 = vsel %vm422, %v405, 0.0
          %469 = vadd.xlane.f32.xlu0 %v468
          %v470 = vpop.xlane.xlu0 %469
          %v471 = vsel %vm422, %v406, 0.0
          %472 = vadd.xlane.f32.xlu0 %v471
          %v473 = vpop.xlane.xlu0 %472
          %v474 = vsel %vm422, %v407, 0.0
          %475 = vadd.xlane.f32.xlu0 %v474
          %v476 = vpop.xlane.xlu0 %475
          %v477 = vsel %vm422, %v408, 0.0
          %478 = vadd.xlane.f32.xlu0 %v477
          %v479 = vpop.xlane.xlu0 %478
          %v480 = vsel %vm422, %v409, 0.0
          %481 = vadd.xlane.f32.xlu0 %v480
          %v482 = vpop.xlane.xlu0 %481
          %v483 = vsel %vm422, %v410, 0.0
          %484 = vadd.xlane.f32.xlu0 %v483
          %v485 = vpop.xlane.xlu0 %484
          %v486 = vsel %vm422, %v411, 0.0
          %487 = vadd.xlane.f32.xlu0 %v486
          %v488 = vpop.xlane.xlu0 %487
          %v489 = vsel %vm422, %v412, 0.0
          %490 = vadd.xlane.f32.xlu0 %v489
          %v491 = vpop.xlane.xlu0 %490
          %v492 = vsel %vm422, %v413, 0.0
          %493 = vadd.xlane.f32.xlu0 %v492
          %v494 = vpop.xlane.xlu0 %493
          %v495 = vsel %vm422, %v414, 0.0
          %496 = vadd.xlane.f32.xlu0 %v495
          %v497 = vpop.xlane.xlu0 %496
          %v498 = vsel %vm422, %v415, 0.0
          %499 = vadd.xlane.f32.xlu0 %v498
          %v500 = vpop.xlane.xlu0 %499
          %v501 = vsel %vm422, %v416, 0.0
          %502 = vadd.xlane.f32.xlu0 %v501
          %v503 = vpop.xlane.xlu0 %502
          %v504 = vsel %vm422, %v417, 0.0
          %505 = vadd.xlane.f32.xlu0 %v504
          %v506 = vpop.xlane.xlu0 %505
          %v507 = vsel %vm422, %v418, 0.0
          %508 = vadd.xlane.f32.xlu0 %v507
          %v509 = vpop.xlane.xlu0 %508
          %v510 = vsel %vm422, %v419, 0.0
          %511 = vadd.xlane.f32.xlu0 %v510
          %v512 = vpop.xlane.xlu0 %511
          %v513 = vsel %vm422, %v420, 0.0
          %514 = vadd.xlane.f32.xlu0 %v513
          %v515 = vpop.xlane.xlu0 %514
          %v516 = vsel %vm422, %v421, 0.0
          %517 = vadd.xlane.f32.xlu0 %v516
          %v518 = vpop.xlane.xlu0 %517
          %vm519 = vcmask 7168
          %520 = vst.msk [vmem:[#allocation3] sm:$0xff] %vm519, %v425
          %521 = vst.msk [vmem:[#allocation3 + $0x8] sm:$0xff] %vm519, %v428
          %522 = vst.msk [vmem:[#allocation3 + $0x10] sm:$0xff] %vm519, %v431
          %523 = vst.msk [vmem:[#allocation3 + $0x18] sm:$0xff] %vm519, %v434
          %524 = vst.msk [vmem:[#allocation3 + $0x20] sm:$0xff] %vm519, %v437
          %525 = vst.msk [vmem:[#allocation3 + $0x28] sm:$0xff] %vm519, %v440
          %526 = vst.msk [vmem:[#allocation3 + $0x30] sm:$0xff] %vm519, %v443
          %527 = vst.msk [vmem:[#allocation3 + $0x38] sm:$0xff] %vm519, %v446
          %528 = vst.msk [vmem:[#allocation3 + $0x40] sm:$0xff] %vm519, %v449
          %529 = vst.msk [vmem:[#allocation3 + $0x48] sm:$0xff] %vm519, %v452
          %530 = vst.msk [vmem:[#allocation3 + $0x50] sm:$0xff] %vm519, %v455
          %531 = vst.msk [vmem:[#allocation3 + $0x58] sm:$0xff] %vm519, %v458
          %532 = vst.msk [vmem:[#allocation3 + $0x60] sm:$0xff] %vm519, %v461
          %533 = vst.msk [vmem:[#allocation3 + $0x68] sm:$0xff] %vm519, %v464
          %534 = vst.msk [vmem:[#allocation3 + $0x70] sm:$0xff] %vm519, %v467
          %535 = vst.msk [vmem:[#allocation3 + $0x78] sm:$0xff] %vm519, %v470
          %536 = vst.msk [vmem:[#allocation3 + $0x80] sm:$0xff] %vm519, %v473
          %537 = vst.msk [vmem:[#allocation3 + $0x88] sm:$0xff] %vm519, %v476
          %538 = vst.msk [vmem:[#allocation3 + $0x90] sm:$0xff] %vm519, %v479
          %539 = vst.msk [vmem:[#allocation3 + $0x98] sm:$0xff] %vm519, %v482
          %540 = vst.msk [vmem:[#allocation3 + $0xa0] sm:$0xff] %vm519, %v485
          %541 = vst.msk [vmem:[#allocation3 + $0xa8] sm:$0xff] %vm519, %v488
          %542 = vst.msk [vmem:[#allocation3 + $0xb0] sm:$0xff] %vm519, %v491
          %543 = vst.msk [vmem:[#allocation3 + $0xb8] sm:$0xff] %vm519, %v494
          %544 = vst.msk [vmem:[#allocation3 + $0xc0] sm:$0xff] %vm519, %v497
          %545 = vst.msk [vmem:[#allocation3 + $0xc8] sm:$0xff] %vm519, %v500
          %546 = vst.msk [vmem:[#allocation3 + $0xd0] sm:$0xff] %vm519, %v503
          %547 = vst.msk [vmem:[#allocation3 + $0xd8] sm:$0xff] %vm519, %v506
          %548 = vst.msk [vmem:[#allocation3 + $0xe0] sm:$0xff] %vm519, %v509
          %549 = vst.msk [vmem:[#allocation3 + $0xe8] sm:$0xff] %vm519, %v512
          %550 = vst.msk [vmem:[#allocation3 + $0xf0] sm:$0xff] %vm519, %v515
          %551 = vst.msk [vmem:[#allocation3 + $0xf8] sm:$0xff] %vm519, %v518
        $region44: #{_lambda_.3} parent=35 // pred_fallthru
          _
        %v552 = vld [vmem:[%s283] sm:$0xf]
        %v553 = vld [vmem:[%s283 + $0x4] sm:$0xf]
        %v554 = vld [vmem:[%s283 + $0x8] sm:$0xf]
        %v555 = vld [vmem:[%s283 + $0xc] sm:$0xf]
        %v556 = vld [vmem:[%s283 + $0x10] sm:$0xf]
        %v557 = vld [vmem:[%s283 + $0x14] sm:$0xf]
        %v558 = vld [vmem:[%s283 + $0x18] sm:$0xf]
        %v559 = vld [vmem:[%s283 + $0x1c] sm:$0xf]
        %v560 = vld [vmem:[%s283 + $0x20] sm:$0xf]
        %v561 = vld [vmem:[%s283 + $0x24] sm:$0xf]
        %v562 = vld [vmem:[%s283 + $0x28] sm:$0xf]
        %v563 = vld [vmem:[%s283 + $0x2c] sm:$0xf]
        %v564 = vld [vmem:[%s283 + $0x30] sm:$0xf]
        %v565 = vld [vmem:[%s283 + $0x34] sm:$0xf]
        %v566 = vld [vmem:[%s283 + $0x38] sm:$0xf]
        %v567 = vld [vmem:[%s283 + $0x3c] sm:$0xf]
        %v568 = vld [vmem:[%s283 + $0x40] sm:$0xf]
        %v569 = vld [vmem:[%s283 + $0x44] sm:$0xf]
        %v570 = vld [vmem:[%s283 + $0x48] sm:$0xf]
        %v571 = vld [vmem:[%s283 + $0x4c] sm:$0xf]
        %v572 = vld [vmem:[%s283 + $0x50] sm:$0xf]
        %v573 = vld [vmem:[%s283 + $0x54] sm:$0xf]
        %v574 = vld [vmem:[%s283 + $0x58] sm:$0xf]
        %v575 = vld [vmem:[%s283 + $0x5c] sm:$0xf]
        %v576 = vld [vmem:[%s283 + $0x60] sm:$0xf]
        %v577 = vld [vmem:[%s283 + $0x64] sm:$0xf]
        %v578 = vld [vmem:[%s283 + $0x68] sm:$0xf]
        %v579 = vld [vmem:[%s283 + $0x6c] sm:$0xf]
        %v580 = vld [vmem:[%s283 + $0x70] sm:$0xf]
        %v581 = vld [vmem:[%s283 + $0x74] sm:$0xf]
        %v582 = vld [vmem:[%s283 + $0x78] sm:$0xf]
        %v583 = vld [vmem:[%s283 + $0x7c] sm:$0xf]
        %v584 = vld [vmem:[%s293] sm:$0xff]
        %v585 = vld [vmem:[%s293 + $0x8] sm:$0xff]
        %v586 = vld [vmem:[%s293 + $0x10] sm:$0xff]
        %v587 = vld [vmem:[%s293 + $0x18] sm:$0xff]
        %v588 = vld [vmem:[%s293 + $0x20] sm:$0xff]
        %v589 = vld [vmem:[%s293 + $0x28] sm:$0xff]
        %v590 = vld [vmem:[%s293 + $0x30] sm:$0xff]
        %v591 = vld [vmem:[%s293 + $0x38] sm:$0xff]
        %v592 = vld [vmem:[%s293 + $0x40] sm:$0xff]
        %v593 = vld [vmem:[%s293 + $0x48] sm:$0xff]
        %v594 = vld [vmem:[%s293 + $0x50] sm:$0xff]
        %v595 = vld [vmem:[%s293 + $0x58] sm:$0xff]
        %v596 = vld [vmem:[%s293 + $0x60] sm:$0xff]
        %v597 = vld [vmem:[%s293 + $0x68] sm:$0xff]
        %v598 = vld [vmem:[%s293 + $0x70] sm:$0xff]
        %v599 = vld [vmem:[%s293 + $0x78] sm:$0xff]
        %v632 = vunpack.c.l.b16 %v552
        %v633 = vunpack.c.l.b16 %v553
        %v634 = vunpack.c.l.b16 %v554
        %v635 = vunpack.c.l.b16 %v555
        %v636 = vunpack.c.l.b16 %v556
        %v637 = vunpack.c.l.b16 %v557
        %v638 = vunpack.c.l.b16 %v558
        %v639 = vunpack.c.l.b16 %v559
        %v640 = vunpack.c.l.b16 %v560
        %v641 = vunpack.c.l.b16 %v561
        %v642 = vunpack.c.l.b16 %v562
        %v643 = vunpack.c.l.b16 %v563
        %v644 = vunpack.c.l.b16 %v564
        %v645 = vunpack.c.l.b16 %v565
        %v646 = vunpack.c.l.b16 %v566
        %v647 = vunpack.c.l.b16 %v567
        %v648 = vunpack.c.l.b16 %v568
        %v649 = vunpack.c.l.b16 %v569
        %v650 = vunpack.c.l.b16 %v570
        %v651 = vunpack.c.l.b16 %v571
        %v652 = vunpack.c.l.b16 %v572
        %v653 = vunpack.c.l.b16 %v573
        %v654 = vunpack.c.l.b16 %v574
        %v655 = vunpack.c.l.b16 %v575
        %v656 = vunpack.c.l.b16 %v576
        %v657 = vunpack.c.l.b16 %v577
        %v658 = vunpack.c.l.b16 %v578
        %v659 = vunpack.c.l.b16 %v579
        %v660 = vunpack.c.l.b16 %v580
        %v661 = vunpack.c.l.b16 %v581
        %v662 = vunpack.c.l.b16 %v582
        %v663 = vunpack.c.l.b16 %v583
        %v664 = vpack.c.b16 %v633, %v632
        %v665 = vpack.c.b16 %v635, %v634
        %v666 = vpack.c.b16 %v637, %v636
        %v667 = vpack.c.b16 %v639, %v638
        %v668 = vpack.c.b16 %v641, %v640
        %v669 = vpack.c.b16 %v643, %v642
        %v670 = vpack.c.b16 %v645, %v644
        %v671 = vpack.c.b16 %v647, %v646
        %v672 = vpack.c.b16 %v649, %v648
        %v673 = vpack.c.b16 %v651, %v650
        %v674 = vpack.c.b16 %v653, %v652
        %v675 = vpack.c.b16 %v655, %v654
        %v676 = vpack.c.b16 %v657, %v656
        %v677 = vpack.c.b16 %v659, %v658
        %v678 = vpack.c.b16 %v661, %v660
        %v679 = vpack.c.b16 %v663, %v662
        %v712 = vunpack.c.l.b16 %v584
        %v713 = vunpack.c.h.b16 %v584
        %v714 = vunpack.c.l.b16 %v585
        %v715 = vunpack.c.h.b16 %v585
        %v716 = vunpack.c.l.b16 %v586
        %v717 = vunpack.c.h.b16 %v586
        %v718 = vunpack.c.l.b16 %v587
        %v719 = vunpack.c.h.b16 %v587
        %v720 = vunpack.c.l.b16 %v588
        %v721 = vunpack.c.h.b16 %v588
        %v722 = vunpack.c.l.b16 %v589
        %v723 = vunpack.c.h.b16 %v589
        %v724 = vunpack.c.l.b16 %v590
        %v725 = vunpack.c.h.b16 %v590
        %v726 = vunpack.c.l.b16 %v591
        %v727 = vunpack.c.h.b16 %v591
        %v728 = vunpack.c.l.b16 %v592
        %v729 = vunpack.c.h.b16 %v592
        %v730 = vunpack.c.l.b16 %v593
        %v731 = vunpack.c.h.b16 %v593
        %v732 = vunpack.c.l.b16 %v594
        %v733 = vunpack.c.h.b16 %v594
        %v734 = vunpack.c.l.b16 %v595
        %v735 = vunpack.c.h.b16 %v595
        %v736 = vunpack.c.l.b16 %v596
        %v737 = vunpack.c.h.b16 %v596
        %v738 = vunpack.c.l.b16 %v597
        %v739 = vunpack.c.h.b16 %v597
        %v740 = vunpack.c.l.b16 %v598
        %v741 = vunpack.c.h.b16 %v598
        %v742 = vunpack.c.l.b16 %v599
        %v743 = vunpack.c.h.b16 %v599
        %v744 = vpack.c.b16 %v714, %v712
        %v745 = vpack.c.b16 %v715, %v713
        %v746 = vpack.c.b16 %v718, %v716
        %v747 = vpack.c.b16 %v719, %v717
        %v748 = vpack.c.b16 %v722, %v720
        %v749 = vpack.c.b16 %v723, %v721
        %v750 = vpack.c.b16 %v726, %v724
        %v751 = vpack.c.b16 %v727, %v725
        %v752 = vpack.c.b16 %v730, %v728
        %v753 = vpack.c.b16 %v731, %v729
        %v754 = vpack.c.b16 %v734, %v732
        %v755 = vpack.c.b16 %v735, %v733
        %v756 = vpack.c.b16 %v738, %v736
        %v757 = vpack.c.b16 %v739, %v737
        %v758 = vpack.c.b16 %v742, %v740
        %v759 = vpack.c.b16 %v743, %v741
        %776 = vmatprep.subr.bf16.mxu0 %v745
        %777 = vmatpush1.bf16.msra.mxu0 %v744
        %778 = vmatprep.subr.bf16.mxu0 %v747
        %779 = vmatpush1.bf16.msra.mxu0 %v746
        %780 = vmatprep.subr.bf16.mxu0 %v749
        %781 = vmatpush1.bf16.msra.mxu0 %v748
        %782 = vmatprep.subr.bf16.mxu0 %v751
        %783 = vmatpush1.bf16.msra.mxu0 %v750
        %784 = vmatprep.subr.bf16.mxu0 %v753
        %785 = vmatpush1.bf16.msra.mxu0 %v752
        %786 = vmatprep.subr.bf16.mxu0 %v755
        %787 = vmatpush1.bf16.msra.mxu0 %v754
        %788 = vmatprep.subr.bf16.mxu0 %v757
        %789 = vmatpush1.bf16.msra.mxu0 %v756
        %790 = vmatprep.subr.bf16.mxu0 %v759
        %791 = vmatpush1.bf16.msra.mxu0 %v758
        %792 = vmatprep.subr.bf16.mxu0 0
        %793 = vmatpush1.bf16.msra.mxu0 0
        %794 = vmatprep.subr.bf16.mxu0 0
        %795 = vmatpush1.bf16.msra.mxu0 0
        %796 = vmatprep.subr.bf16.mxu0 0
        %797 = vmatpush1.bf16.msra.mxu0 0
        %798 = vmatprep.subr.bf16.mxu0 0
        %799 = vmatpush1.bf16.msra.mxu0 0
        %800 = vmatprep.subr.bf16.mxu0 0
        %801 = vmatpush1.bf16.msra.mxu0 0
        %802 = vmatprep.subr.bf16.mxu0 0
        %803 = vmatpush1.bf16.msra.mxu0 0
        %804 = vmatprep.subr.bf16.mxu0 0
        %805 = vmatpush1.bf16.msra.mxu0 0
        %806 = vmatprep.subr.bf16.mxu0 0
        %807 = vmatpush1.bf16.msra.mxu0 0
        %808 = vmatprep.mubr.bf16.mxu0 0
        %809 = vmatmul.mubr.bf16.gmra.mrb[0].mxu0 %v664
        %v810 = vpop.f32.mrb[0].mxu0
        %v811 = vadd.f32 0.0, %v810
        %v812 = vpop.f32.mrb[0].mxu0
        %v813 = vadd.f32 0.0, %v812
        %v814 = vpop.f32.mrb[0].mxu0
        %v815 = vadd.f32 0.0, %v814
        %v816 = vpop.f32.mrb[0].mxu0
        %v817 = vadd.f32 0.0, %v816
        %818 = vmatprep.mubr.bf16.mxu0 0
        %819 = vmatmul.mubr.bf16.gmra.mrb[0].mxu0 %v665
        %v820 = vpop.f32.mrb[0].mxu0
        %v821 = vadd.f32 0.0, %v820
        %v822 = vpop.f32.mrb[0].mxu0
        %v823 = vadd.f32 0.0, %v822
        %v824 = vpop.f32.mrb[0].mxu0
        %v825 = vadd.f32 0.0, %v824
        %v826 = vpop.f32.mrb[0].mxu0
        %v827 = vadd.f32 0.0, %v826
        %828 = vmatprep.mubr.bf16.mxu0 0
        %829 = vmatmul.mubr.bf16.gmra.mrb[0].mxu0 %v666
        %v830 = vpop.f32.mrb[0].mxu0
        %v831 = vadd.f32 0.0, %v830
        %v832 = vpop.f32.mrb[0].mxu0
        %v833 = vadd.f32 0.0, %v832
        %v834 = vpop.f32.mrb[0].mxu0
        %v835 = vadd.f32 0.0, %v834
        %v836 = vpop.f32.mrb[0].mxu0
        %v837 = vadd.f32 0.0, %v836
        %838 = vmatprep.mubr.bf16.mxu0 0
        %839 = vmatmul.mubr.bf16.gmra.mrb[0].mxu0 %v667
        %v840 = vpop.f32.mrb[0].mxu0
        %v841 = vadd.f32 0.0, %v840
        %v842 = vpop.f32.mrb[0].mxu0
        %v843 = vadd.f32 0.0, %v842
        %v844 = vpop.f32.mrb[0].mxu0
        %v845 = vadd.f32 0.0, %v844
        %v846 = vpop.f32.mrb[0].mxu0
        %v847 = vadd.f32 0.0, %v846
        %848 = vmatprep.mubr.bf16.mxu0 0
        %849 = vmatmul.mubr.bf16.gmra.mrb[0].mxu0 %v668
        %v850 = vpop.f32.mrb[0].mxu0
        %v851 = vadd.f32 0.0, %v850
        %v852 = vpop.f32.mrb[0].mxu0
        %v853 = vadd.f32 0.0, %v852
        %v854 = vpop.f32.mrb[0].mxu0
        %v855 = vadd.f32 0.0, %v854
        %v856 = vpop.f32.mrb[0].mxu0
        %v857 = vadd.f32 0.0, %v856
        %858 = vmatprep.mubr.bf16.mxu0 0
        %859 = vmatmul.mubr.bf16.gmra.mrb[0].mxu0 %v669
        %v860 = vpop.f32.mrb[0].mxu0
        %v861 = vadd.f32 0.0, %v860
        %v862 = vpop.f32.mrb[0].mxu0
        %v863 = vadd.f32 0.0, %v862
        %v864 = vpop.f32.mrb[0].mxu0
        %v865 = vadd.f32 0.0, %v864
        %v866 = vpop.f32.mrb[0].mxu0
        %v867 = vadd.f32 0.0, %v866
        %868 = vmatprep.mubr.bf16.mxu0 0
        %869 = vmatmul.mubr.bf16.gmra.mrb[0].mxu0 %v670
        %v870 = vpop.f32.mrb[0].mxu0
        %v871 = vadd.f32 0.0, %v870
        %v872 = vpop.f32.mrb[0].mxu0
        %v873 = vadd.f32 0.0, %v872
        %v874 = vpop.f32.mrb[0].mxu0
        %v875 = vadd.f32 0.0, %v874
        %v876 = vpop.f32.mrb[0].mxu0
        %v877 = vadd.f32 0.0, %v876
        %878 = vmatprep.mubr.bf16.mxu0 0
        %879 = vmatmul.mubr.bf16.gmra.mrb[0].mxu0 %v671
        %v880 = vpop.f32.mrb[0].mxu0
        %v881 = vadd.f32 0.0, %v880
        %v882 = vpop.f32.mrb[0].mxu0
        %v883 = vadd.f32 0.0, %v882
        %v884 = vpop.f32.mrb[0].mxu0
        %v885 = vadd.f32 0.0, %v884
        %v886 = vpop.f32.mrb[0].mxu0
        %v887 = vadd.f32 0.0, %v886
        %888 = vmatprep.mubr.bf16.mxu0 0
        %889 = vmatmul.mubr.bf16.gmra.mrb[0].mxu0 %v672
        %v890 = vpop.f32.mrb[0].mxu0
        %v891 = vadd.f32 0.0, %v890
        %v892 = vpop.f32.mrb[0].mxu0
        %v893 = vadd.f32 0.0, %v892
        %v894 = vpop.f32.mrb[0].mxu0
        %v895 = vadd.f32 0.0, %v894
        %v896 = vpop.f32.mrb[0].mxu0
        %v897 = vadd.f32 0.0, %v896
        %898 = vmatprep.mubr.bf16.mxu0 0
        %899 = vmatmul.mubr.bf16.gmra.mrb[0].mxu0 %v673
        %v900 = vpop.f32.mrb[0].mxu0
        %v901 = vadd.f32 0.0, %v900
        %v902 = vpop.f32.mrb[0].mxu0
        %v903 = vadd.f32 0.0, %v902
        %v904 = vpop.f32.mrb[0].mxu0
        %v905 = vadd.f32 0.0, %v904
        %v906 = vpop.f32.mrb[0].mxu0
        %v907 = vadd.f32 0.0, %v906
        %908 = vmatprep.mubr.bf16.mxu0 0
        %909 = vmatmul.mubr.bf16.gmra.mrb[0].mxu0 %v674
        %v910 = vpop.f32.mrb[0].mxu0
        %v911 = vadd.f32 0.0, %v910
        %v912 = vpop.f32.mrb[0].mxu0
        %v913 = vadd.f32 0.0, %v912
        %v914 = vpop.f32.mrb[0].mxu0
        %v915 = vadd.f32 0.0, %v914
        %v916 = vpop.f32.mrb[0].mxu0
        %v917 = vadd.f32 0.0, %v916
        %918 = vmatprep.mubr.bf16.mxu0 0
        %919 = vmatmul.mubr.bf16.gmra.mrb[0].mxu0 %v675
        %v920 = vpop.f32.mrb[0].mxu0
        %v921 = vadd.f32 0.0, %v920
        %v922 = vpop.f32.mrb[0].mxu0
        %v923 = vadd.f32 0.0, %v922
        %v924 = vpop.f32.mrb[0].mxu0
        %v925 = vadd.f32 0.0, %v924
        %v926 = vpop.f32.mrb[0].mxu0
        %v927 = vadd.f32 0.0, %v926
        %928 = vmatprep.mubr.bf16.mxu0 0
        %929 = vmatmul.mubr.bf16.gmra.mrb[0].mxu0 %v676
        %v930 = vpop.f32.mrb[0].mxu0
        %v931 = vadd.f32 0.0, %v930
        %v932 = vpop.f32.mrb[0].mxu0
        %v933 = vadd.f32 0.0, %v932
        %v934 = vpop.f32.mrb[0].mxu0
        %v935 = vadd.f32 0.0, %v934
        %v936 = vpop.f32.mrb[0].mxu0
        %v937 = vadd.f32 0.0, %v936
        %938 = vmatprep.mubr.bf16.mxu0 0
        %939 = vmatmul.mubr.bf16.gmra.mrb[0].mxu0 %v677
        %v940 = vpop.f32.mrb[0].mxu0
        %v941 = vadd.f32 0.0, %v940
        %v942 = vpop.f32.mrb[0].mxu0
        %v943 = vadd.f32 0.0, %v942
        %v944 = vpop.f32.mrb[0].mxu0
        %v945 = vadd.f32 0.0, %v944
        %v946 = vpop.f32.mrb[0].mxu0
        %v947 = vadd.f32 0.0, %v946
        %948 = vmatprep.mubr.bf16.mxu0 0
        %949 = vmatmul.mubr.bf16.gmra.mrb[0].mxu0 %v678
        %v950 = vpop.f32.mrb[0].mxu0
        %v951 = vadd.f32 0.0, %v950
        %v952 = vpop.f32.mrb[0].mxu0
        %v953 = vadd.f32 0.0, %v952
        %v954 = vpop.f32.mrb[0].mxu0
        %v955 = vadd.f32 0.0, %v954
        %v956 = vpop.f32.mrb[0].mxu0
        %v957 = vadd.f32 0.0, %v956
        %958 = vmatprep.mubr.bf16.mxu0 0
        %959 = vmatmul.mubr.bf16.gmra.mrb[0].mxu0 %v679
        %v960 = vpop.f32.mrb[0].mxu0
        %v961 = vadd.f32 0.0, %v960
        %v962 = vpop.f32.mrb[0].mxu0
        %v963 = vadd.f32 0.0, %v962
        %v964 = vpop.f32.mrb[0].mxu0
        %v965 = vadd.f32 0.0, %v964
        %v966 = vpop.f32.mrb[0].mxu0
        %v967 = vadd.f32 0.0, %v966
        %968 = vdwg.mxu0
        %v969 = vmax.f32 %v811, 0.0
        %v970 = vmax.f32 %v813, 0.0
        %v971 = vmax.f32 %v815, 0.0
        %v972 = vmax.f32 %v817, 0.0
        %v973 = vmax.f32 %v821, 0.0
        %v974 = vmax.f32 %v823, 0.0
        %v975 = vmax.f32 %v825, 0.0
        %v976 = vmax.f32 %v827, 0.0
        %v977 = vmax.f32 %v831, 0.0
        %v978 = vmax.f32 %v833, 0.0
        %v979 = vmax.f32 %v835, 0.0
        %v980 = vmax.f32 %v837, 0.0
        %v981 = vmax.f32 %v841, 0.0
        %v982 = vmax.f32 %v843, 0.0
        %v983 = vmax.f32 %v845, 0.0
        %v984 = vmax.f32 %v847, 0.0
        %v985 = vmax.f32 %v851, 0.0
        %v986 = vmax.f32 %v853, 0.0
        %v987 = vmax.f32 %v855, 0.0
        %v988 = vmax.f32 %v857, 0.0
        %v989 = vmax.f32 %v861, 0.0
        %v990 = vmax.f32 %v863, 0.0
        %v991 = vmax.f32 %v865, 0.0
        %v992 = vmax.f32 %v867, 0.0
        %v993 = vmax.f32 %v871, 0.0
        %v994 = vmax.f32 %v873, 0.0
        %v995 = vmax.f32 %v875, 0.0
        %v996 = vmax.f32 %v877, 0.0
        %v997 = vmax.f32 %v881, 0.0
        %v998 = vmax.f32 %v883, 0.0
        %v999 = vmax.f32 %v885, 0.0
        %v1000 = vmax.f32 %v887, 0.0
        %v1001 = vmax.f32 %v891, 0.0
        %v1002 = vmax.f32 %v893, 0.0
        %v1003 = vmax.f32 %v895, 0.0
        %v1004 = vmax.f32 %v897, 0.0
        %v1005 = vmax.f32 %v901, 0.0
        %v1006 = vmax.f32 %v903, 0.0
        %v1007 = vmax.f32 %v905, 0.0
        %v1008 = vmax.f32 %v907, 0.0
        %v1009 = vmax.f32 %v911, 0.0
        %v1010 = vmax.f32 %v913, 0.0
        %v1011 = vmax.f32 %v915, 0.0
        %v1012 = vmax.f32 %v917, 0.0
        %v1013 = vmax.f32 %v921, 0.0
        %v1014 = vmax.f32 %v923, 0.0
        %v1015 = vmax.f32 %v925, 0.0
        %v1016 = vmax.f32 %v927, 0.0
        %v1017 = vmax.f32 %v931, 0.0
        %v1018 = vmax.f32 %v933, 0.0
        %v1019 = vmax.f32 %v935, 0.0
        %v1020 = vmax.f32 %v937, 0.0
        %v1021 = vmax.f32 %v941, 0.0
        %v1022 = vmax.f32 %v943, 0.0
        %v1023 = vmax.f32 %v945, 0.0
        %v1024 = vmax.f32 %v947, 0.0
        %v1025 = vmax.f32 %v951, 0.0
        %v1026 = vmax.f32 %v953, 0.0
        %v1027 = vmax.f32 %v955, 0.0
        %v1028 = vmax.f32 %v957, 0.0
        %v1029 = vmax.f32 %v961, 0.0
        %v1030 = vmax.f32 %v963, 0.0
        %v1031 = vmax.f32 %v965, 0.0
        %v1032 = vmax.f32 %v967, 0.0
        %v1033 = vld [vmem:[#allocation3] sm:$0xff]
        %v1034 = vld [vmem:[#allocation3 + $0x8] sm:$0xff]
        %v1035 = vld [vmem:[#allocation3 + $0x10] sm:$0xff]
        %v1036 = vld [vmem:[#allocation3 + $0x18] sm:$0xff]
        %v1037 = vld [vmem:[#allocation3 + $0x20] sm:$0xff]
        %v1038 = vld [vmem:[#allocation3 + $0x28] sm:$0xff]
        %v1039 = vld [vmem:[#allocation3 + $0x30] sm:$0xff]
        %v1040 = vld [vmem:[#allocation3 + $0x38] sm:$0xff]
        %v1041 = vld [vmem:[#allocation3 + $0x40] sm:$0xff]
        %v1042 = vld [vmem:[#allocation3 + $0x48] sm:$0xff]
        %v1043 = vld [vmem:[#allocation3 + $0x50] sm:$0xff]
        %v1044 = vld [vmem:[#allocation3 + $0x58] sm:$0xff]
        %v1045 = vld [vmem:[#allocation3 + $0x60] sm:$0xff]
        %v1046 = vld [vmem:[#allocation3 + $0x68] sm:$0xff]
        %v1047 = vld [vmem:[#allocation3 + $0x70] sm:$0xff]
        %v1048 = vld [vmem:[#allocation3 + $0x78] sm:$0xff]
        %v1049 = vld [vmem:[#allocation3 + $0x80] sm:$0xff]
        %v1050 = vld [vmem:[#allocation3 + $0x88] sm:$0xff]
        %v1051 = vld [vmem:[#allocation3 + $0x90] sm:$0xff]
        %v1052 = vld [vmem:[#allocation3 + $0x98] sm:$0xff]
        %v1053 = vld [vmem:[#allocation3 + $0xa0] sm:$0xff]
        %v1054 = vld [vmem:[#allocation3 + $0xa8] sm:$0xff]
        %v1055 = vld [vmem:[#allocation3 + $0xb0] sm:$0xff]
        %v1056 = vld [vmem:[#allocation3 + $0xb8] sm:$0xff]
        %v1057 = vld [vmem:[#allocation3 + $0xc0] sm:$0xff]
        %v1058 = vld [vmem:[#allocation3 + $0xc8] sm:$0xff]
        %v1059 = vld [vmem:[#allocation3 + $0xd0] sm:$0xff]
        %v1060 = vld [vmem:[#allocation3 + $0xd8] sm:$0xff]
        %v1061 = vld [vmem:[#allocation3 + $0xe0] sm:$0xff]
        %v1062 = vld [vmem:[#allocation3 + $0xe8] sm:$0xff]
        %v1063 = vld [vmem:[#allocation3 + $0xf0] sm:$0xff]
        %v1064 = vld [vmem:[#allocation3 + $0xf8] sm:$0xff]
        %1066 = vset.pattern.permute.xlu0 0
        %1067 = vperm.xlu0 %1066, %v1033
        %v1068 = vpop.permute.xlu0 %1067
        %1071 = vset.pattern.permute.xlu0 0
        %1072 = vperm.xlu0 %1071, %v1034
        %v1073 = vpop.permute.xlu0 %1072
        %1076 = vset.pattern.permute.xlu0 0
        %1077 = vperm.xlu0 %1076, %v1035
        %v1078 = vpop.permute.xlu0 %1077
        %1081 = vset.pattern.permute.xlu0 0
        %1082 = vperm.xlu0 %1081, %v1036
        %v1083 = vpop.permute.xlu0 %1082
        %1086 = vset.pattern.permute.xlu0 0
        %1087 = vperm.xlu0 %1086, %v1037
        %v1088 = vpop.permute.xlu0 %1087
        %1091 = vset.pattern.permute.xlu0 0
        %1092 = vperm.xlu0 %1091, %v1038
        %v1093 = vpop.permute.xlu0 %1092
        %1096 = vset.pattern.permute.xlu0 0
        %1097 = vperm.xlu0 %1096, %v1039
        %v1098 = vpop.permute.xlu0 %1097
        %1101 = vset.pattern.permute.xlu0 0
        %1102 = vperm.xlu0 %1101, %v1040
        %v1103 = vpop.permute.xlu0 %1102
        %1106 = vset.pattern.permute.xlu0 0
        %1107 = vperm.xlu0 %1106, %v1041
        %v1108 = vpop.permute.xlu0 %1107
        %1111 = vset.pattern.permute.xlu0 0
        %1112 = vperm.xlu0 %1111, %v1042
        %v1113 = vpop.permute.xlu0 %1112
        %1116 = vset.pattern.permute.xlu0 0
        %1117 = vperm.xlu0 %1116, %v1043
        %v1118 = vpop.permute.xlu0 %1117
        %1121 = vset.pattern.permute.xlu0 0
        %1122 = vperm.xlu0 %1121, %v1044
        %v1123 = vpop.permute.xlu0 %1122
        %1126 = vset.pattern.permute.xlu0 0
        %1127 = vperm.xlu0 %1126, %v1045
        %v1128 = vpop.permute.xlu0 %1127
        %1131 = vset.pattern.permute.xlu0 0
        %1132 = vperm.xlu0 %1131, %v1046
        %v1133 = vpop.permute.xlu0 %1132
        %1136 = vset.pattern.permute.xlu0 0
        %1137 = vperm.xlu0 %1136, %v1047
        %v1138 = vpop.permute.xlu0 %1137
        %1141 = vset.pattern.permute.xlu0 0
        %1142 = vperm.xlu0 %1141, %v1048
        %v1143 = vpop.permute.xlu0 %1142
        %1146 = vset.pattern.permute.xlu0 0
        %1147 = vperm.xlu0 %1146, %v1049
        %v1148 = vpop.permute.xlu0 %1147
        %1151 = vset.pattern.permute.xlu0 0
        %1152 = vperm.xlu0 %1151, %v1050
        %v1153 = vpop.permute.xlu0 %1152
        %1156 = vset.pattern.permute.xlu0 0
        %1157 = vperm.xlu0 %1156, %v1051
        %v1158 = vpop.permute.xlu0 %1157
        %1161 = vset.pattern.permute.xlu0 0
        %1162 = vperm.xlu0 %1161, %v1052
        %v1163 = vpop.permute.xlu0 %1162
        %1166 = vset.pattern.permute.xlu0 0
        %1167 = vperm.xlu0 %1166, %v1053
        %v1168 = vpop.permute.xlu0 %1167
        %1171 = vset.pattern.permute.xlu0 0
        %1172 = vperm.xlu0 %1171, %v1054
        %v1173 = vpop.permute.xlu0 %1172
        %1176 = vset.pattern.permute.xlu0 0
        %1177 = vperm.xlu0 %1176, %v1055
        %v1178 = vpop.permute.xlu0 %1177
        %1181 = vset.pattern.permute.xlu0 0
        %1182 = vperm.xlu0 %1181, %v1056
        %v1183 = vpop.permute.xlu0 %1182
        %1186 = vset.pattern.permute.xlu0 0
        %1187 = vperm.xlu0 %1186, %v1057
        %v1188 = vpop.permute.xlu0 %1187
        %1191 = vset.pattern.permute.xlu0 0
        %1192 = vperm.xlu0 %1191, %v1058
        %v1193 = vpop.permute.xlu0 %1192
        %1196 = vset.pattern.permute.xlu0 0
        %1197 = vperm.xlu0 %1196, %v1059
        %v1198 = vpop.permute.xlu0 %1197
        %1201 = vset.pattern.permute.xlu0 0
        %1202 = vperm.xlu0 %1201, %v1060
        %v1203 = vpop.permute.xlu0 %1202
        %1206 = vset.pattern.permute.xlu0 0
        %1207 = vperm.xlu0 %1206, %v1061
        %v1208 = vpop.permute.xlu0 %1207
        %1211 = vset.pattern.permute.xlu0 0
        %1212 = vperm.xlu0 %1211, %v1062
        %v1213 = vpop.permute.xlu0 %1212
        %1216 = vset.pattern.permute.xlu0 0
        %1217 = vperm.xlu0 %1216, %v1063
        %v1218 = vpop.permute.xlu0 %1217
        %1221 = vset.pattern.permute.xlu0 0
        %1222 = vperm.xlu0 %1221, %v1064
        %v1223 = vpop.permute.xlu0 %1222
        %v1225 = vmul.f32 %v969, %v1068
        %v1226 = vmul.f32 %v970, %v1068
        %v1227 = vmul.f32 %v971, %v1073
        %v1228 = vmul.f32 %v972, %v1073
        %v1229 = vmul.f32 %v973, %v1078
        %v1230 = vmul.f32 %v974, %v1078
        %v1231 = vmul.f32 %v975, %v1083
        %v1232 = vmul.f32 %v976, %v1083
        %v1233 = vmul.f32 %v977, %v1088
        %v1234 = vmul.f32 %v978, %v1088
        %v1235 = vmul.f32 %v979, %v1093
        %v1236 = vmul.f32 %v980, %v1093
        %v1237 = vmul.f32 %v981, %v1098
        %v1238 = vmul.f32 %v982, %v1098
        %v1239 = vmul.f32 %v983, %v1103
        %v1240 = vmul.f32 %v984, %v1103
        %v1241 = vmul.f32 %v985, %v1108
        %v1242 = vmul.f32 %v986, %v1108
        %v1243 = vmul.f32 %v987, %v1113
        %v1244 = vmul.f32 %v988, %v1113
        %v1245 = vmul.f32 %v989, %v1118
        %v1246 = vmul.f32 %v990, %v1118
        %v1247 = vmul.f32 %v991, %v1123
        %v1248 = vmul.f32 %v992, %v1123
        %v1249 = vmul.f32 %v993, %v1128
        %v1250 = vmul.f32 %v994, %v1128
        %v1251 = vmul.f32 %v995, %v1133
        %v1252 = vmul.f32 %v996, %v1133
        %v1253 = vmul.f32 %v997, %v1138
        %v1254 = vmul.f32 %v998, %v1138
        %v1255 = vmul.f32 %v999, %v1143
        %v1256 = vmul.f32 %v1000, %v1143
        %v1257 = vmul.f32 %v1001, %v1148
        %v1258 = vmul.f32 %v1002, %v1148
        %v1259 = vmul.f32 %v1003, %v1153
        %v1260 = vmul.f32 %v1004, %v1153
        %v1261 = vmul.f32 %v1005, %v1158
        %v1262 = vmul.f32 %v1006, %v1158
        %v1263 = vmul.f32 %v1007, %v1163
        %v1264 = vmul.f32 %v1008, %v1163
        %v1265 = vmul.f32 %v1009, %v1168
        %v1266 = vmul.f32 %v1010, %v1168
        %v1267 = vmul.f32 %v1011, %v1173
        %v1268 = vmul.f32 %v1012, %v1173
        %v1269 = vmul.f32 %v1013, %v1178
        %v1270 = vmul.f32 %v1014, %v1178
        %v1271 = vmul.f32 %v1015, %v1183
        %v1272 = vmul.f32 %v1016, %v1183
        %v1273 = vmul.f32 %v1017, %v1188
        %v1274 = vmul.f32 %v1018, %v1188
        %v1275 = vmul.f32 %v1019, %v1193
        %v1276 = vmul.f32 %v1020, %v1193
        %v1277 = vmul.f32 %v1021, %v1198
        %v1278 = vmul.f32 %v1022, %v1198
        %v1279 = vmul.f32 %v1023, %v1203
        %v1280 = vmul.f32 %v1024, %v1203
        %v1281 = vmul.f32 %v1025, %v1208
        %v1282 = vmul.f32 %v1026, %v1208
        %v1283 = vmul.f32 %v1027, %v1213
        %v1284 = vmul.f32 %v1028, %v1213
        %v1285 = vmul.f32 %v1029, %v1218
        %v1286 = vmul.f32 %v1030, %v1218
        %v1287 = vmul.f32 %v1031, %v1223
        %v1288 = vmul.f32 %v1032, %v1223
        %v1289 = vpack.c.bf16 %v1227, %v1225
        %v1290 = vpack.c.bf16 %v1228, %v1226
        %v1291 = vpack.c.bf16 %v1231, %v1229
        %v1292 = vpack.c.bf16 %v1232, %v1230
        %v1293 = vpack.c.bf16 %v1235, %v1233
        %v1294 = vpack.c.bf16 %v1236, %v1234
        %v1295 = vpack.c.bf16 %v1239, %v1237
        %v1296 = vpack.c.bf16 %v1240, %v1238
        %v1297 = vpack.c.bf16 %v1243, %v1241
        %v1298 = vpack.c.bf16 %v1244, %v1242
        %v1299 = vpack.c.bf16 %v1247, %v1245
        %v1300 = vpack.c.bf16 %v1248, %v1246
        %v1301 = vpack.c.bf16 %v1251, %v1249
        %v1302 = vpack.c.bf16 %v1252, %v1250
        %v1303 = vpack.c.bf16 %v1255, %v1253
        %v1304 = vpack.c.bf16 %v1256, %v1254
        %v1305 = vpack.c.bf16 %v1259, %v1257
        %v1306 = vpack.c.bf16 %v1260, %v1258
        %v1307 = vpack.c.bf16 %v1263, %v1261
        %v1308 = vpack.c.bf16 %v1264, %v1262
        %v1309 = vpack.c.bf16 %v1267, %v1265
        %v1310 = vpack.c.bf16 %v1268, %v1266
        %v1311 = vpack.c.bf16 %v1271, %v1269
        %v1312 = vpack.c.bf16 %v1272, %v1270
        %v1313 = vpack.c.bf16 %v1275, %v1273
        %v1314 = vpack.c.bf16 %v1276, %v1274
        %v1315 = vpack.c.bf16 %v1279, %v1277
        %v1316 = vpack.c.bf16 %v1280, %v1278
        %v1317 = vpack.c.bf16 %v1283, %v1281
        %v1318 = vpack.c.bf16 %v1284, %v1282
        %v1319 = vpack.c.bf16 %v1287, %v1285
        %v1320 = vpack.c.bf16 %v1288, %v1286
        %v1321 = vld [vmem:[#allocation2] sm:$0xff]
        %v1322 = vld [vmem:[#allocation2 + $0x8] sm:$0xff]
        %v1323 = vld [vmem:[#allocation2 + $0x10] sm:$0xff]
        %v1324 = vld [vmem:[#allocation2 + $0x18] sm:$0xff]
        %v1325 = vld [vmem:[#allocation2 + $0x20] sm:$0xff]
        %v1326 = vld [vmem:[#allocation2 + $0x28] sm:$0xff]
        %v1327 = vld [vmem:[#allocation2 + $0x30] sm:$0xff]
        %v1328 = vld [vmem:[#allocation2 + $0x38] sm:$0xff]
        %v1329 = vld [vmem:[#allocation2 + $0x40] sm:$0xff]
        %v1330 = vld [vmem:[#allocation2 + $0x48] sm:$0xff]
        %v1331 = vld [vmem:[#allocation2 + $0x50] sm:$0xff]
        %v1332 = vld [vmem:[#allocation2 + $0x58] sm:$0xff]
        %v1333 = vld [vmem:[#allocation2 + $0x60] sm:$0xff]
        %v1334 = vld [vmem:[#allocation2 + $0x68] sm:$0xff]
        %v1335 = vld [vmem:[#allocation2 + $0x70] sm:$0xff]
        %v1336 = vld [vmem:[#allocation2 + $0x78] sm:$0xff]
        %v1337 = vld [vmem:[#allocation2 + $0x80] sm:$0xff]
        %v1338 = vld [vmem:[#allocation2 + $0x88] sm:$0xff]
        %v1339 = vld [vmem:[#allocation2 + $0x90] sm:$0xff]
        %v1340 = vld [vmem:[#allocation2 + $0x98] sm:$0xff]
        %v1341 = vld [vmem:[#allocation2 + $0xa0] sm:$0xff]
        %v1342 = vld [vmem:[#allocation2 + $0xa8] sm:$0xff]
        %v1343 = vld [vmem:[#allocation2 + $0xb0] sm:$0xff]
        %v1344 = vld [vmem:[#allocation2 + $0xb8] sm:$0xff]
        %v1345 = vld [vmem:[#allocation2 + $0xc0] sm:$0xff]
        %v1346 = vld [vmem:[#allocation2 + $0xc8] sm:$0xff]
        %v1347 = vld [vmem:[#allocation2 + $0xd0] sm:$0xff]
        %v1348 = vld [vmem:[#allocation2 + $0xd8] sm:$0xff]
        %v1349 = vld [vmem:[#allocation2 + $0xe0] sm:$0xff]
        %v1350 = vld [vmem:[#allocation2 + $0xe8] sm:$0xff]
        %v1351 = vld [vmem:[#allocation2 + $0xf0] sm:$0xff]
        %v1352 = vld [vmem:[#allocation2 + $0xf8] sm:$0xff]
        %v1353 = vld [vmem:[%s303] sm:$0xf]
        %v1354 = vld [vmem:[%s303 + $0x4] sm:$0xf]
        %v1355 = vld [vmem:[%s303 + $0x8] sm:$0xf]
        %v1356 = vld [vmem:[%s303 + $0xc] sm:$0xf]
        %v1357 = vld [vmem:[%s303 + $0x10] sm:$0xf]
        %v1358 = vld [vmem:[%s303 + $0x14] sm:$0xf]
        %v1359 = vld [vmem:[%s303 + $0x18] sm:$0xf]
        %v1360 = vld [vmem:[%s303 + $0x1c] sm:$0xf]
        %v1361 = vld [vmem:[%s303 + $0x20] sm:$0xf]
        %v1362 = vld [vmem:[%s303 + $0x24] sm:$0xf]
        %v1363 = vld [vmem:[%s303 + $0x28] sm:$0xf]
        %v1364 = vld [vmem:[%s303 + $0x2c] sm:$0xf]
        %v1365 = vld [vmem:[%s303 + $0x30] sm:$0xf]
        %v1366 = vld [vmem:[%s303 + $0x34] sm:$0xf]
        %v1367 = vld [vmem:[%s303 + $0x38] sm:$0xf]
        %v1368 = vld [vmem:[%s303 + $0x3c] sm:$0xf]
        %v1369 = vld [vmem:[%s303 + $0x40] sm:$0xf]
        %v1370 = vld [vmem:[%s303 + $0x44] sm:$0xf]
        %v1371 = vld [vmem:[%s303 + $0x48] sm:$0xf]
        %v1372 = vld [vmem:[%s303 + $0x4c] sm:$0xf]
        %v1373 = vld [vmem:[%s303 + $0x50] sm:$0xf]
        %v1374 = vld [vmem:[%s303 + $0x54] sm:$0xf]
        %v1375 = vld [vmem:[%s303 + $0x58] sm:$0xf]
        %v1376 = vld [vmem:[%s303 + $0x5c] sm:$0xf]
        %v1377 = vld [vmem:[%s303 + $0x60] sm:$0xf]
        %v1378 = vld [vmem:[%s303 + $0x64] sm:$0xf]
        %v1379 = vld [vmem:[%s303 + $0x68] sm:$0xf]
        %v1380 = vld [vmem:[%s303 + $0x6c] sm:$0xf]
        %v1381 = vld [vmem:[%s303 + $0x70] sm:$0xf]
        %v1382 = vld [vmem:[%s303 + $0x74] sm:$0xf]
        %v1383 = vld [vmem:[%s303 + $0x78] sm:$0xf]
        %v1384 = vld [vmem:[%s303 + $0x7c] sm:$0xf]
        %v1417 = vunpack.c.l.b16 %v1353
        %v1418 = vunpack.c.l.b16 %v1354
        %v1419 = vunpack.c.l.b16 %v1355
        %v1420 = vunpack.c.l.b16 %v1356
        %v1421 = vunpack.c.l.b16 %v1357
        %v1422 = vunpack.c.l.b16 %v1358
        %v1423 = vunpack.c.l.b16 %v1359
        %v1424 = vunpack.c.l.b16 %v1360
        %v1425 = vunpack.c.l.b16 %v1361
        %v1426 = vunpack.c.l.b16 %v1362
        %v1427 = vunpack.c.l.b16 %v1363
        %v1428 = vunpack.c.l.b16 %v1364
        %v1429 = vunpack.c.l.b16 %v1365
        %v1430 = vunpack.c.l.b16 %v1366
        %v1431 = vunpack.c.l.b16 %v1367
        %v1432 = vunpack.c.l.b16 %v1368
        %v1433 = vunpack.c.l.b16 %v1369
        %v1434 = vunpack.c.l.b16 %v1370
        %v1435 = vunpack.c.l.b16 %v1371
        %v1436 = vunpack.c.l.b16 %v1372
        %v1437 = vunpack.c.l.b16 %v1373
        %v1438 = vunpack.c.l.b16 %v1374
        %v1439 = vunpack.c.l.b16 %v1375
        %v1440 = vunpack.c.l.b16 %v1376
        %v1441 = vunpack.c.l.b16 %v1377
        %v1442 = vunpack.c.l.b16 %v1378
        %v1443 = vunpack.c.l.b16 %v1379
        %v1444 = vunpack.c.l.b16 %v1380
        %v1445 = vunpack.c.l.b16 %v1381
        %v1446 = vunpack.c.l.b16 %v1382
        %v1447 = vunpack.c.l.b16 %v1383
        %v1448 = vunpack.c.l.b16 %v1384
        %v1449 = vpack.c.b16 %v1418, %v1417
        %v1450 = vpack.c.b16 %v1420, %v1419
        %v1451 = vpack.c.b16 %v1422, %v1421
        %v1452 = vpack.c.b16 %v1424, %v1423
        %v1453 = vpack.c.b16 %v1426, %v1425
        %v1454 = vpack.c.b16 %v1428, %v1427
        %v1455 = vpack.c.b16 %v1430, %v1429
        %v1456 = vpack.c.b16 %v1432, %v1431
        %v1457 = vpack.c.b16 %v1434, %v1433
        %v1458 = vpack.c.b16 %v1436, %v1435
        %v1459 = vpack.c.b16 %v1438, %v1437
        %v1460 = vpack.c.b16 %v1440, %v1439
        %v1461 = vpack.c.b16 %v1442, %v1441
        %v1462 = vpack.c.b16 %v1444, %v1443
        %v1463 = vpack.c.b16 %v1446, %v1445
        %v1464 = vpack.c.b16 %v1448, %v1447
        %1481 = vmatprep.subr.bf16.mxu0 0
        %1482 = vmatpush1.bf16.msra.mxu0 %v1449
        %1483 = vmatprep.subr.bf16.mxu0 0
        %1484 = vmatpush1.bf16.msra.mxu0 %v1450
        %1485 = vmatprep.subr.bf16.mxu0 0
        %1486 = vmatpush1.bf16.msra.mxu0 %v1451
        %1487 = vmatprep.subr.bf16.mxu0 0
        %1488 = vmatpush1.bf16.msra.mxu0 %v1452
        %1489 = vmatprep.subr.bf16.mxu0 0
        %1490 = vmatpush1.bf16.msra.mxu0 %v1453
        %1491 = vmatprep.subr.bf16.mxu0 0
        %1492 = vmatpush1.bf16.msra.mxu0 %v1454
        %1493 = vmatprep.subr.bf16.mxu0 0
        %1494 = vmatpush1.bf16.msra.mxu0 %v1455
        %1495 = vmatprep.subr.bf16.mxu0 0
        %1496 = vmatpush1.bf16.msra.mxu0 %v1456
        %1497 = vmatprep.subr.bf16.mxu0 0
        %1498 = vmatpush1.bf16.msra.mxu0 %v1457
        %1499 = vmatprep.subr.bf16.mxu0 0
        %1500 = vmatpush1.bf16.msra.mxu0 %v1458
        %1501 = vmatprep.subr.bf16.mxu0 0
        %1502 = vmatpush1.bf16.msra.mxu0 %v1459
        %1503 = vmatprep.subr.bf16.mxu0 0
        %1504 = vmatpush1.bf16.msra.mxu0 %v1460
        %1505 = vmatprep.subr.bf16.mxu0 0
        %1506 = vmatpush1.bf16.msra.mxu0 %v1461
        %1507 = vmatprep.subr.bf16.mxu0 0
        %1508 = vmatpush1.bf16.msra.mxu0 %v1462
        %1509 = vmatprep.subr.bf16.mxu0 0
        %1510 = vmatpush1.bf16.msra.mxu0 %v1463
        %1511 = vmatprep.subr.bf16.mxu0 0
        %1512 = vmatpush1.bf16.msra.mxu0 %v1464
        %1513 = vmatprep.mubr.bf16.mxu0 %v1290
        %1514 = vmatmul.mubr.bf16.gmra.mrb[0].mxu0 %v1289
        %v1515 = vpop.f32.mrb[0].mxu0
        %v1516 = vadd.f32 0.0, %v1515
        %v1517 = vpop.f32.mrb[0].mxu0
        %v1518 = vpop.f32.mrb[0].mxu0
        %v1519 = vadd.f32 0.0, %v1518
        %v1520 = vpop.f32.mrb[0].mxu0
        %1521 = vmatprep.mubr.bf16.mxu0 %v1292
        %1522 = vmatmul.mubr.bf16.gmra.mrb[0].mxu0 %v1291
        %v1523 = vpop.f32.mrb[0].mxu0
        %v1524 = vadd.f32 0.0, %v1523
        %v1525 = vpop.f32.mrb[0].mxu0
        %v1526 = vpop.f32.mrb[0].mxu0
        %v1527 = vadd.f32 0.0, %v1526
        %v1528 = vpop.f32.mrb[0].mxu0
        %1529 = vmatprep.mubr.bf16.mxu0 %v1294
        %1530 = vmatmul.mubr.bf16.gmra.mrb[0].mxu0 %v1293
        %v1531 = vpop.f32.mrb[0].mxu0
        %v1532 = vadd.f32 0.0, %v1531
        %v1533 = vpop.f32.mrb[0].mxu0
        %v1534 = vpop.f32.mrb[0].mxu0
        %v1535 = vadd.f32 0.0, %v1534
        %v1536 = vpop.f32.mrb[0].mxu0
        %1537 = vmatprep.mubr.bf16.mxu0 %v1296
        %1538 = vmatmul.mubr.bf16.gmra.mrb[0].mxu0 %v1295
        %v1539 = vpop.f32.mrb[0].mxu0
        %v1540 = vadd.f32 0.0, %v1539
        %v1541 = vpop.f32.mrb[0].mxu0
        %v1542 = vpop.f32.mrb[0].mxu0
        %v1543 = vadd.f32 0.0, %v1542
        %v1544 = vpop.f32.mrb[0].mxu0
        %1545 = vmatprep.mubr.bf16.mxu0 %v1298
        %1546 = vmatmul.mubr.bf16.gmra.mrb[0].mxu0 %v1297
        %v1547 = vpop.f32.mrb[0].mxu0
        %v1548 = vadd.f32 0.0, %v1547
        %v1549 = vpop.f32.mrb[0].mxu0
        %v1550 = vpop.f32.mrb[0].mxu0
        %v1551 = vadd.f32 0.0, %v1550
        %v1552 = vpop.f32.mrb[0].mxu0
        %1553 = vmatprep.mubr.bf16.mxu0 %v1300
        %1554 = vmatmul.mubr.bf16.gmra.mrb[0].mxu0 %v1299
        %v1555 = vpop.f32.mrb[0].mxu0
        %v1556 = vadd.f32 0.0, %v1555
        %v1557 = vpop.f32.mrb[0].mxu0
        %v1558 = vpop.f32.mrb[0].mxu0
        %v1559 = vadd.f32 0.0, %v1558
        %v1560 = vpop.f32.mrb[0].mxu0
        %1561 = vmatprep.mubr.bf16.mxu0 %v1302
        %1562 = vmatmul.mubr.bf16.gmra.mrb[0].mxu0 %v1301
        %v1563 = vpop.f32.mrb[0].mxu0
        %v1564 = vadd.f32 0.0, %v1563
        %v1565 = vpop.f32.mrb[0].mxu0
        %v1566 = vpop.f32.mrb[0].mxu0
        %v1567 = vadd.f32 0.0, %v1566
        %v1568 = vpop.f32.mrb[0].mxu0
        %1569 = vmatprep.mubr.bf16.mxu0 %v1304
        %1570 = vmatmul.mubr.bf16.gmra.mrb[0].mxu0 %v1303
        %v1571 = vpop.f32.mrb[0].mxu0
        %v1572 = vadd.f32 0.0, %v1571
        %v1573 = vpop.f32.mrb[0].mxu0
        %v1574 = vpop.f32.mrb[0].mxu0
        %v1575 = vadd.f32 0.0, %v1574
        %v1576 = vpop.f32.mrb[0].mxu0
        %1577 = vmatprep.mubr.bf16.mxu0 %v1306
        %1578 = vmatmul.mubr.bf16.gmra.mrb[0].mxu0 %v1305
        %v1579 = vpop.f32.mrb[0].mxu0
        %v1580 = vadd.f32 0.0, %v1579
        %v1581 = vpop.f32.mrb[0].mxu0
        %v1582 = vpop.f32.mrb[0].mxu0
        %v1583 = vadd.f32 0.0, %v1582
        %v1584 = vpop.f32.mrb[0].mxu0
        %1585 = vmatprep.mubr.bf16.mxu0 %v1308
        %1586 = vmatmul.mubr.bf16.gmra.mrb[0].mxu0 %v1307
        %v1587 = vpop.f32.mrb[0].mxu0
        %v1588 = vadd.f32 0.0, %v1587
        %v1589 = vpop.f32.mrb[0].mxu0
        %v1590 = vpop.f32.mrb[0].mxu0
        %v1591 = vadd.f32 0.0, %v1590
        %v1592 = vpop.f32.mrb[0].mxu0
        %1593 = vmatprep.mubr.bf16.mxu0 %v1310
        %1594 = vmatmul.mubr.bf16.gmra.mrb[0].mxu0 %v1309
        %v1595 = vpop.f32.mrb[0].mxu0
        %v1596 = vadd.f32 0.0, %v1595
        %v1597 = vpop.f32.mrb[0].mxu0
        %v1598 = vpop.f32.mrb[0].mxu0
        %v1599 = vadd.f32 0.0, %v1598
        %v1600 = vpop.f32.mrb[0].mxu0
        %1601 = vmatprep.mubr.bf16.mxu0 %v1312
        %1602 = vmatmul.mubr.bf16.gmra.mrb[0].mxu0 %v1311
        %v1603 = vpop.f32.mrb[0].mxu0
        %v1604 = vadd.f32 0.0, %v1603
        %v1605 = vpop.f32.mrb[0].mxu0
        %v1606 = vpop.f32.mrb[0].mxu0
        %v1607 = vadd.f32 0.0, %v1606
        %v1608 = vpop.f32.mrb[0].mxu0
        %1609 = vmatprep.mubr.bf16.mxu0 %v1314
        %1610 = vmatmul.mubr.bf16.gmra.mrb[0].mxu0 %v1313
        %v1611 = vpop.f32.mrb[0].mxu0
        %v1612 = vadd.f32 0.0, %v1611
        %v1613 = vpop.f32.mrb[0].mxu0
        %v1614 = vpop.f32.mrb[0].mxu0
        %v1615 = vadd.f32 0.0, %v1614
        %v1616 = vpop.f32.mrb[0].mxu0
        %1617 = vmatprep.mubr.bf16.mxu0 %v1316
        %1618 = vmatmul.mubr.bf16.gmra.mrb[0].mxu0 %v1315
        %v1619 = vpop.f32.mrb[0].mxu0
        %v1620 = vadd.f32 0.0, %v1619
        %v1621 = vpop.f32.mrb[0].mxu0
        %v1622 = vpop.f32.mrb[0].mxu0
        %v1623 = vadd.f32 0.0, %v1622
        %v1624 = vpop.f32.mrb[0].mxu0
        %1625 = vmatprep.mubr.bf16.mxu0 %v1318
        %1626 = vmatmul.mubr.bf16.gmra.mrb[0].mxu0 %v1317
        %v1627 = vpop.f32.mrb[0].mxu0
        %v1628 = vadd.f32 0.0, %v1627
        %v1629 = vpop.f32.mrb[0].mxu0
        %v1630 = vpop.f32.mrb[0].mxu0
        %v1631 = vadd.f32 0.0, %v1630
        %v1632 = vpop.f32.mrb[0].mxu0
        %1633 = vmatprep.mubr.bf16.mxu0 %v1320
        %1634 = vmatmul.mubr.bf16.gmra.mrb[0].mxu0 %v1319
        %v1635 = vpop.f32.mrb[0].mxu0
        %v1636 = vadd.f32 0.0, %v1635
        %v1637 = vpop.f32.mrb[0].mxu0
        %v1638 = vpop.f32.mrb[0].mxu0
        %v1639 = vadd.f32 0.0, %v1638
        %v1640 = vpop.f32.mrb[0].mxu0
        %1641 = vdwg.mxu0
        %v1642 = vadd.f32 %v1321, %v1516
        %v1643 = vadd.f32 %v1322, %v1519
        %v1644 = vadd.f32 %v1323, %v1524
        %v1645 = vadd.f32 %v1324, %v1527
        %v1646 = vadd.f32 %v1325, %v1532
        %v1647 = vadd.f32 %v1326, %v1535
        %v1648 = vadd.f32 %v1327, %v1540
        %v1649 = vadd.f32 %v1328, %v1543
        %v1650 = vadd.f32 %v1329, %v1548
        %v1651 = vadd.f32 %v1330, %v1551
        %v1652 = vadd.f32 %v1331, %v1556
        %v1653 = vadd.f32 %v1332, %v1559
        %v1654 = vadd.f32 %v1333, %v1564
        %v1655 = vadd.f32 %v1334, %v1567
        %v1656 = vadd.f32 %v1335, %v1572
        %v1657 = vadd.f32 %v1336, %v1575
        %v1658 = vadd.f32 %v1337, %v1580
        %v1659 = vadd.f32 %v1338, %v1583
        %v1660 = vadd.f32 %v1339, %v1588
        %v1661 = vadd.f32 %v1340, %v1591
        %v1662 = vadd.f32 %v1341, %v1596
        %v1663 = vadd.f32 %v1342, %v1599
        %v1664 = vadd.f32 %v1343, %v1604
        %v1665 = vadd.f32 %v1344, %v1607
        %v1666 = vadd.f32 %v1345, %v1612
        %v1667 = vadd.f32 %v1346, %v1615
        %v1668 = vadd.f32 %v1347, %v1620
        %v1669 = vadd.f32 %v1348, %v1623
        %v1670 = vadd.f32 %v1349, %v1628
        %v1671 = vadd.f32 %v1350, %v1631
        %v1672 = vadd.f32 %v1351, %v1636
        %v1673 = vadd.f32 %v1352, %v1639
        %1674 = vst [vmem:[#allocation2] sm:$0xff] %v1642
        %1675 = vst [vmem:[#allocation2 + $0x8] sm:$0xff] %v1643
        %1676 = vst [vmem:[#allocation2 + $0x10] sm:$0xff] %v1644
        %1677 = vst [vmem:[#allocation2 + $0x18] sm:$0xff] %v1645
        %1678 = vst [vmem:[#allocation2 + $0x20] sm:$0xff] %v1646
        %1679 = vst [vmem:[#allocation2 + $0x28] sm:$0xff] %v1647
        %1680 = vst [vmem:[#allocation2 + $0x30] sm:$0xff] %v1648
        %1681 = vst [vmem:[#allocation2 + $0x38] sm:$0xff] %v1649
        %1682 = vst [vmem:[#allocation2 + $0x40] sm:$0xff] %v1650
        %1683 = vst [vmem:[#allocation2 + $0x48] sm:$0xff] %v1651
        %1684 = vst [vmem:[#allocation2 + $0x50] sm:$0xff] %v1652
        %1685 = vst [vmem:[#allocation2 + $0x58] sm:$0xff] %v1653
        %1686 = vst [vmem:[#allocation2 + $0x60] sm:$0xff] %v1654
        %1687 = vst [vmem:[#allocation2 + $0x68] sm:$0xff] %v1655
        %1688 = vst [vmem:[#allocation2 + $0x70] sm:$0xff] %v1656
        %1689 = vst [vmem:[#allocation2 + $0x78] sm:$0xff] %v1657
        %1690 = vst [vmem:[#allocation2 + $0x80] sm:$0xff] %v1658
        %1691 = vst [vmem:[#allocation2 + $0x88] sm:$0xff] %v1659
        %1692 = vst [vmem:[#allocation2 + $0x90] sm:$0xff] %v1660
        %1693 = vst [vmem:[#allocation2 + $0x98] sm:$0xff] %v1661
        %1694 = vst [vmem:[#allocation2 + $0xa0] sm:$0xff] %v1662
        %1695 = vst [vmem:[#allocation2 + $0xa8] sm:$0xff] %v1663
        %1696 = vst [vmem:[#allocation2 + $0xb0] sm:$0xff] %v1664
        %1697 = vst [vmem:[#allocation2 + $0xb8] sm:$0xff] %v1665
        %1698 = vst [vmem:[#allocation2 + $0xc0] sm:$0xff] %v1666
        %1699 = vst [vmem:[#allocation2 + $0xc8] sm:$0xff] %v1667
        %1700 = vst [vmem:[#allocation2 + $0xd0] sm:$0xff] %v1668
        %1701 = vst [vmem:[#allocation2 + $0xd8] sm:$0xff] %v1669
        %1702 = vst [vmem:[#allocation2 + $0xe0] sm:$0xff] %v1670
        %1703 = vst [vmem:[#allocation2 + $0xe8] sm:$0xff] %v1671
        %1704 = vst [vmem:[#allocation2 + $0xf0] sm:$0xff] %v1672
        %1705 = vst [vmem:[#allocation2 + $0xf8] sm:$0xff] %v1673
        %p1706 = scmp.eq.s32.totalorder %s24, 3
        %p1707 = pnand %p1706, %p314
        %p1708 = pneg %p1707
        // Predicated region
        $region45: #{_lambda_.3} parent=35 // pred_check
          _
        $region46: #{_lambda_.3} parent=35 // pred_check_branch
          %1710 = sbr.rel (%p1707) target = $region48
        $region47: #{_lambda_.3} parent=35 // pred_region
          %v1711 = vld [vmem:[#allocation2] sm:$0xff]
          %v1712 = vld [vmem:[#allocation2 + $0x8] sm:$0xff]
          %v1713 = vld [vmem:[#allocation2 + $0x10] sm:$0xff]
          %v1714 = vld [vmem:[#allocation2 + $0x18] sm:$0xff]
          %v1715 = vld [vmem:[#allocation2 + $0x20] sm:$0xff]
          %v1716 = vld [vmem:[#allocation2 + $0x28] sm:$0xff]
          %v1717 = vld [vmem:[#allocation2 + $0x30] sm:$0xff]
          %v1718 = vld [vmem:[#allocation2 + $0x38] sm:$0xff]
          %v1719 = vld [vmem:[#allocation2 + $0x40] sm:$0xff]
          %v1720 = vld [vmem:[#allocation2 + $0x48] sm:$0xff]
          %v1721 = vld [vmem:[#allocation2 + $0x50] sm:$0xff]
          %v1722 = vld [vmem:[#allocation2 + $0x58] sm:$0xff]
          %v1723 = vld [vmem:[#allocation2 + $0x60] sm:$0xff]
          %v1724 = vld [vmem:[#allocation2 + $0x68] sm:$0xff]
          %v1725 = vld [vmem:[#allocation2 + $0x70] sm:$0xff]
          %v1726 = vld [vmem:[#allocation2 + $0x78] sm:$0xff]
          %v1727 = vld [vmem:[#allocation2 + $0x80] sm:$0xff]
          %v1728 = vld [vmem:[#allocation2 + $0x88] sm:$0xff]
          %v1729 = vld [vmem:[#allocation2 + $0x90] sm:$0xff]
          %v1730 = vld [vmem:[#allocation2 + $0x98] sm:$0xff]
          %v1731 = vld [vmem:[#allocation2 + $0xa0] sm:$0xff]
          %v1732 = vld [vmem:[#allocation2 + $0xa8] sm:$0xff]
          %v1733 = vld [vmem:[#allocation2 + $0xb0] sm:$0xff]
          %v1734 = vld [vmem:[#allocation2 + $0xb8] sm:$0xff]
          %v1735 = vld [vmem:[#allocation2 + $0xc0] sm:$0xff]
          %v1736 = vld [vmem:[#allocation2 + $0xc8] sm:$0xff]
          %v1737 = vld [vmem:[#allocation2 + $0xd0] sm:$0xff]
          %v1738 = vld [vmem:[#allocation2 + $0xd8] sm:$0xff]
          %v1739 = vld [vmem:[#allocation2 + $0xe0] sm:$0xff]
          %v1740 = vld [vmem:[#allocation2 + $0xe8] sm:$0xff]
          %v1741 = vld [vmem:[#allocation2 + $0xf0] sm:$0xff]
          %v1742 = vld [vmem:[#allocation2 + $0xf8] sm:$0xff]
          %1743 = vst [vmem:[%s278] sm:$0xff] %v1711
          %1744 = vst [vmem:[%s278 + $0x8] sm:$0xff] %v1712
          %1745 = vst [vmem:[%s278 + $0x10] sm:$0xff] %v1713
          %1746 = vst [vmem:[%s278 + $0x18] sm:$0xff] %v1714
          %1747 = vst [vmem:[%s278 + $0x20] sm:$0xff] %v1715
          %1748 = vst [vmem:[%s278 + $0x28] sm:$0xff] %v1716
          %1749 = vst [vmem:[%s278 + $0x30] sm:$0xff] %v1717
          %1750 = vst [vmem:[%s278 + $0x38] sm:$0xff] %v1718
          %1751 = vst [vmem:[%s278 + $0x40] sm:$0xff] %v1719
          %1752 = vst [vmem:[%s278 + $0x48] sm:$0xff] %v1720
          %1753 = vst [vmem:[%s278 + $0x50] sm:$0xff] %v1721
          %1754 = vst [vmem:[%s278 + $0x58] sm:$0xff] %v1722
          %1755 = vst [vmem:[%s278 + $0x60] sm:$0xff] %v1723
          %1756 = vst [vmem:[%s278 + $0x68] sm:$0xff] %v1724
          %1757 = vst [vmem:[%s278 + $0x70] sm:$0xff] %v1725
          %1758 = vst [vmem:[%s278 + $0x78] sm:$0xff] %v1726
          %1759 = vst [vmem:[%s278 + $0x80] sm:$0xff] %v1727
          %1760 = vst [vmem:[%s278 + $0x88] sm:$0xff] %v1728
          %1761 = vst [vmem:[%s278 + $0x90] sm:$0xff] %v1729
          %1762 = vst [vmem:[%s278 + $0x98] sm:$0xff] %v1730
          %1763 = vst [vmem:[%s278 + $0xa0] sm:$0xff] %v1731
          %1764 = vst [vmem:[%s278 + $0xa8] sm:$0xff] %v1732
          %1765 = vst [vmem:[%s278 + $0xb0] sm:$0xff] %v1733
          %1766 = vst [vmem:[%s278 + $0xb8] sm:$0xff] %v1734
          %1767 = vst [vmem:[%s278 + $0xc0] sm:$0xff] %v1735
          %1768 = vst [vmem:[%s278 + $0xc8] sm:$0xff] %v1736
          %1769 = vst [vmem:[%s278 + $0xd0] sm:$0xff] %v1737
          %1770 = vst [vmem:[%s278 + $0xd8] sm:$0xff] %v1738
          %1771 = vst [vmem:[%s278 + $0xe0] sm:$0xff] %v1739
          %1772 = vst [vmem:[%s278 + $0xe8] sm:$0xff] %v1740
          %1773 = vst [vmem:[%s278 + $0xf0] sm:$0xff] %v1741
          %1774 = vst [vmem:[%s278 + $0xf8] sm:$0xff] %v1742
        $region48: #{_lambda_.3} parent=35 // pred_fallthru
          _
        %s1775 = sand.u32 %s153, 1
        %s1776 = scalar_lea.sflag [#allocation5], %s1775
        %s1777 = sand.u32 %s153, 1
        %s1778 = smul.addr %s1777, 256
        %s1779 = scalar_lea.vmem [#allocation4], %s1778
        // Predicated region
        $region49: #{_lambda_.3} parent=35 // pred_check
          %p1780 = pneg %p163
        $region50: #{_lambda_.3} parent=35 // pred_check_branch
          %1782 = sbr.rel (%p1780) target = $region52
        $region51: #{_lambda_.3} parent=35 // pred_region
          %s1783 = smul.u32 32, %s23
          %s1785 = ssub.s32 4096, 4096
          %1786 = vsyncadd %s1776, %s1785
          %s1787 = smul.addr %s1783, 128
          %s1788 = scalar_lea.hbm %s4, %s1787
          %s1789 = sshll.u32 %s1779, 4
          %s1790 = int_to_ptr.vmem [resolvable:$true] %s1789
          %1795 = dma.vmem_to_hbm [thread:$0]  %s1790, 4096, %s1788, %s1776, 128, 128, 8
        $region52: #{_lambda_.3} parent=35 // pred_fallthru
          _
      $region36: #{_lambda_.3} parent=5 // pred_fallthru
        _
      %p1796 = scmp.le.s32.totalorder 2, %s13
      // Predicated region
      $region53: #{_lambda_.3} parent=5 // pred_check
        %p1797 = pneg %p1796
      $region54: #{_lambda_.3} parent=5 // pred_check_branch
        %1799 = sbr.rel (%p1797) target = $region56
      $region55: #{_lambda_.3} parent=5 // pred_region
        %s1800 = ssub.s32 %s13, 2
        // Predicated region
        $region57: #{_lambda_.3} parent=55 // pred_check
          %p1801 = pneg %p169
        $region58: #{_lambda_.3} parent=55 // pred_check_branch
          %1803 = sbr.rel (%p1801) target = $region60
        $region59: #{_lambda_.3} parent=55 // pred_region
          %s1804 = sand.u32 %s154, 1
          %s1805 = scalar_lea.sflag [#allocation5], %s1804
          %s1806 = sand.u32 %s154, 1
          %s1807 = smul.addr %s1806, 256
          %s1808 = scalar_lea.vmem [#allocation4], %s1807
          %1809 = dma.done %s1805, 4096
        $region60: #{_lambda_.3} parent=55 // pred_fallthru
          _
      $region56: #{_lambda_.3} parent=5 // pred_fallthru
        _
    $region6: #{_lambda_.3} parent=1 // loop_footer
      %s17 = sadd.s32 1, %s13
    $region7: #{_lambda_.3} parent=1 // loop_footer_branch
      %12 = sbr.rel target = $region3
    $region8: #{_lambda_.3} parent=1 // loop_exit
      _
    %1810 = vsyncpa [#allocation5], 1
    %s1811 = scalar_lea.sflag [#allocation5], 1
    %1812 = vsyncpa %s1811, 1

</llo_original>
